<compile_context>
chip_gen: v6e
topology: v6e:2x2x1
jax: 0.10.0
libtpu: 0.0.40
codegen_flags: <defaults>
</compile_context>

<pallas_src>
import math

import jax
import jax.numpy as jnp
from jax import lax
from jax.experimental import pallas as pl
from jax.experimental.pallas import tpu as pltpu


def _round_up(x, m):
    return (x + m - 1) // m * m


# ----------------------------- Pallas kernel --------------------------------

def _convt_phase_kernel(x_ref, w_ref, b_ref, o_ref):
    # x_ref : (1, 1, sh+KT-1, Wz, KT*Cin)  column-expanded input row strip
    # w_ref : (1, KT, KT*Cin, tn)          per-phase, column-merged sub-kernel
    # b_ref : (1, tn)                      bias tile (f32)
    # o_ref : (1, 1, sh, Wz, tn)           phase-output tile
    kt = w_ref.shape[1]
    ktc = w_ref.shape[2]
    tn = o_ref.shape[-1]
    sh = o_ref.shape[2]
    wz = o_ref.shape[3]
    m2 = sh * wz

    acc = jnp.zeros((m2, tn), jnp.float32)
    for m in range(kt):                       # KT row taps, statically unrolled
        r0 = kt - 1 - m                       # free slice: leading (outer) dim
        lhs = x_ref[0, 0, r0:r0 + sh, :, :].reshape(m2, ktc)   # Wz%8==0 -> free
        acc = acc + jnp.dot(lhs, w_ref[0, m],
                            preferred_element_type=jnp.float32)
    out = acc + b_ref[...].astype(jnp.float32)          # bias kept in f32
    o_ref[0, 0] = out.reshape(sh, wz, tn).astype(o_ref.dtype)


# ------------------------------- Wrapper -------------------------------------

def conv_transpose2d_s2_pallas(x, weight, bias, *, kernel_size,
                               compute_dtype=None):
    """ConvTranspose2d (stride=2, padding=0).  x: [B,Cin,H,W] (NCHW),
    weight: [Cin, Cout, K, K] (PyTorch layout), bias: [Cout].
    `compute_dtype` (e.g. jnp.bfloat16) casts x / weights for the MXU while
    keeping f32 accumulation and f32 bias; output dtype follows x."""
    B, Cin, H, W = x.shape
    w_cin, Cout, KH, KW = weight.shape
    assert w_cin == Cin and KH == KW == kernel_size
    K = kernel_size
    cdt = jnp.dtype(compute_dtype) if compute_dtype is not None else x.dtype
    out_dtype = x.dtype

    Ho = (H - 1) * 2 + K
    Wo = (W - 1) * 2 + K

    KT = -(-K // 2)                 # taps per phase per spatial dim
    Hp2 = H + KT - 1                # phase-output rows
    Wp2 = W + KT - 1                # phase-output cols (true)
    Wz = _round_up(Wp2, 8)          # sublane-aligned cols -> trivial flatten
    KTC = KT * Cin                  # column-merged contraction depth

    Cpad = _round_up(Cout, 128)     # lane-dense output channels
    tn = 128
    NB = Cpad // tn

    in_isz = jnp.dtype(cdt).itemsize
    out_isz = jnp.dtype(out_dtype).itemsize

    # --- choose row-strip height so per-step VMEM stays within budget --------
    def vmem_need(sh_):
        m2 = sh_ * Wz
        in_b = (sh_ + KT - 1) * Wz * KTC * in_isz
        w_b = KT * KTC * tn * in_isz
        out_b = m2 * tn * out_isz
        acc_b = m2 * tn * 4                      # f32 accumulator
        lhs_b = m2 * max(KTC, 128) * in_isz      # staged / lane-padded LHS temp
        return 2 * (in_b + w_b + out_b) + acc_b + lhs_b + (2 << 20)

    budget = 40 << 20
    sh = Hp2
    while sh > 8 and vmem_need(sh) > budget:
        sh = (sh + 1) // 2
    S = -(-Hp2 // sh)
    Hp2z = S * sh                   # row-padded phase-output rows
    Hinz = Hp2z + KT - 1            # expanded input rows incl. row halo
    Win = Wz + KT - 1               # padded input cols incl. col halo

    # --- input: NCHW -> NHWC, zero halo pad, column-tap expand, row strips ---
    x_nhwc = jnp.transpose(x, (0, 2, 3, 1))
    xp = jnp.pad(x_nhwc, ((0, 0),
                          (KT - 1, Hinz - H - (KT - 1)),
                          (KT - 1, Win - W - (KT - 1)),
                          (0, 0)))
    # channel block n holds column shift (KT-1-n):  [B, Hinz, Wz, KT*Cin]
    xcol = jnp.concatenate(
        [xp[:, :, (KT - 1 - n):(KT - 1 - n) + Wz, :] for n in range(KT)],
        axis=-1)
    # row strips with their (KT-1)-row halo:  [B, S, sh+KT-1, Wz, KT*Cin]
    xstrip = jnp.stack(
        [xcol[:, s * sh:s * sh + sh + KT - 1] for s in range(S)],
        axis=1).astype(cdt)

    # --- weights: [Cin,Cout,K,K] -> [phase(4), row-tap KT, KT*Cin, Cpad] ------
    # kernel index kh = 2*m + ph, kw = 2*n + pw (zero-padded where >= K).
    wp = jnp.pad(weight, ((0, 0), (0, Cpad - Cout),
                          (0, 2 * KT - K), (0, 2 * KT - K)))
    wr = wp.reshape(Cin, Cpad, KT, 2, KT, 2)            # [ci, co, m, ph, n, pw]
    w_sub = jnp.transpose(wr, (3, 5, 2, 4, 0, 1))       # [ph, pw, m, n, ci, co]
    w_col = w_sub.reshape(4, KT, KTC, Cpad).astype(cdt)  # [p, m, (n,ci), co]

    bias2 = jnp.pad(bias, (0, Cpad - Cout)).reshape(1, Cpad).astype(jnp.float32)

    flops = int(2 * 4 * B * Hp2z * Wz * KT * KT * Cin * Cpad)
    bytes_accessed = int(xstrip.size * in_isz
                         + w_col.size * in_isz * B * S
                         + 4 * B * Hp2z * Wz * Cpad * out_isz)
    vmem_limit = int(min(max(vmem_need(sh), 32 << 20), 64 << 20))

    z = pl.pallas_call(
        _convt_phase_kernel,
        out_shape=jax.ShapeDtypeStruct((4, B, Hp2z, Wz, Cpad), out_dtype),
        grid=(B, S, 4, NB),
        in_specs=[
            # input block depends only on (b, s): not re-DMA'd across (p, nb)
            pl.BlockSpec((1, 1, sh + KT - 1, Wz, KTC),
                         lambda b, s, p, nb: (b, s, 0, 0, 0)),
            pl.BlockSpec((1, KT, KTC, tn),
                         lambda b, s, p, nb: (p, 0, 0, nb)),
            # bias tile is 512 B; re-DMA'd per step but negligible
            pl.BlockSpec((1, tn),
                         lambda b, s, p, nb: (0, nb)),
        ],
        out_specs=pl.BlockSpec((1, 1, sh, Wz, tn),
                               lambda b, s, p, nb: (p, b, s, 0, nb)),
        compiler_params=pltpu.CompilerParams(
            dimension_semantics=("parallel", "parallel", "parallel", "parallel"),
            vmem_limit_bytes=vmem_limit),
        cost_estimate=pl.CostEstimate(flops=flops, transcendentals=0,
                                      bytes_accessed=bytes_accessed),
    )(xstrip, w_col, bias2)

    # Epilogue: crop channel / spatial padding BEFORE the interleave transpose.
    z = z.reshape(2, 2, B, Hp2z, Wz, Cpad)[:, :, :, :Hp2, :Wp2, :Cout]
    y = jnp.transpose(z, (2, 5, 3, 0, 4, 1))            # [B, Cout, Hp2, 2, Wp2, 2]
    y = y.reshape(B, Cout, 2 * Hp2, 2 * Wp2)
    return y[:, :, :Ho, :Wo]


class TransposedUpsample:
    """Pallas port of the PyTorch TransposedUpsample module (learned 2x up)."""

    def __init__(self, channels, out_channels=None, kernel_size=5,
                 key=jax.random.PRNGKey(0)):
        self.channels = channels
        self.out_channels = out_channels if out_channels is not None else channels
        self.kernel_size = kernel_size
        k1, k2 = jax.random.split(key)
        # Deterministic init mimicking nn.ConvTranspose2d default (U(-b, b)).
        fan_in = self.out_channels * kernel_size * kernel_size
        bound = 1.0 / math.sqrt(fan_in)
        self.weight = jax.random.uniform(
            k1, (channels, self.out_channels, kernel_size, kernel_size),
            jnp.float32, minval=-bound, maxval=bound)
        self.bias = jax.random.uniform(
            k2, (self.out_channels,), jnp.float32, minval=-bound, maxval=bound)

    def __call__(self, x, compute_dtype=None):
        assert x.shape[1] == self.channels
        return conv_transpose2d_s2_pallas(x, self.weight, self.bias,
                                          kernel_size=self.kernel_size,
                                          compute_dtype=compute_dtype)


# ------------------------------- reference -----------------------------------

def _conv_transpose2d_ref(x, weight, bias, stride=2):
    # ConvTranspose2d == conv on stride-dilated input with flipped kernel.
    K = weight.shape[-1]
    w_flip = jnp.flip(weight, axis=(2, 3)).transpose(1, 0, 2, 3)   # [Cout,Cin,K,K]
    y = lax.conv_general_dilated(
        x, w_flip, window_strides=(1, 1),
        padding=((K - 1, K - 1), (K - 1, K - 1)),
        lhs_dilation=(stride, stride),
        dimension_numbers=("NCHW", "OIHW", "NCHW"))
    return y + bias.reshape(1, -1, 1, 1)


# --------------------------------- main ---------------------------------------

if __name__ == "__main__":
    key = jax.random.PRNGKey(0)
    kx, kp, kx2, kp2 = jax.random.split(key, 4)

    # Case 1: module defaults (kernel_size=5, out_channels=channels), f32.
    B, C, H, W = 2, 4, 16, 16
    x = jax.random.normal(kx, (B, C, H, W), jnp.float32)
    up = TransposedUpsample(channels=C, kernel_size=5, key=kp)
    y = jax.block_until_ready(up(x))
    assert y.shape == (B, C, 2 * H + 3, 2 * W + 3), y.shape
    y_ref = _conv_transpose2d_ref(x, up.weight, up.bias)
    err = float(jnp.max(jnp.abs(y - y_ref)))
    assert jnp.allclose(y, y_ref, atol=1e-4, rtol=1e-4), err

    # Case 2: out_channels != channels, even kernel, non-square spatial.
    B2, C2, Co2, H2, W2 = 1, 4, 6, 12, 10
    x2 = jax.random.normal(kx2, (B2, C2, H2, W2), jnp.float32)
    up2 = TransposedUpsample(channels=C2, out_channels=Co2, kernel_size=4, key=kp2)
    y2 = jax.block_until_ready(up2(x2))
    assert y2.shape == (B2, Co2, (H2 - 1) * 2 + 4, (W2 - 1) * 2 + 4), y2.shape
    y2_ref = _conv_transpose2d_ref(x2, up2.weight, up2.bias)
    err2 = float(jnp.max(jnp.abs(y2 - y2_ref)))
    assert jnp.allclose(y2, y2_ref, atol=1e-4, rtol=1e-4), err2

    # Case 3: bf16 compute path (halved DMA / VMEM, f32 accumulation), loose tol.
    y_bf = jax.block_until_ready(up(x, compute_dtype=jnp.bfloat16))
    assert y_bf.shape == y.shape
    err_bf = float(jnp.max(jnp.abs(y_bf - y_ref)))
    assert err_bf < 0.25, err_bf

    print("KERNEL_OK")
</pallas_src>

<mosaic_0001>
module attributes {stable_mosaic.version = 11 : i64} {
  func.func @_convt_phase_kernel(%arg0: i32, %arg1: i32, %arg2: i32, %arg3: i32, %arg4: memref<1x1x20x24x12xf32, #tpu.memory_space<vmem>>, %arg5: memref<1x3x12x128xf32, #tpu.memory_space<vmem>>, %arg6: memref<1x128xf32, #tpu.memory_space<vmem>>, %arg7: memref<1x1x18x24x128xf32, #tpu.memory_space<vmem>>) attributes {dimension_semantics = [#tpu.dimension_semantics<parallel>, #tpu.dimension_semantics<parallel>, #tpu.dimension_semantics<parallel>, #tpu.dimension_semantics<parallel>], iteration_bounds = array<i64: 2, 1, 4, 1>, scalar_prefetch = 0 : i64, scratch_operands = 0 : i64, tpu.core_type = #tpu.core_type<tc>, window_params = [{transform_indices = @transform_0, window_bounds = array<i64: 1, 1, 20, 24, 12>}, {transform_indices = @transform_1, window_bounds = array<i64: 1, 3, 12, 128>}, {transform_indices = @transform_2, window_bounds = array<i64: 1, 128>}, {transform_indices = @transform_3, window_bounds = array<i64: 1, 1, 18, 24, 128>}]} {
    %cst = arith.constant 0.000000e+00 : f32
    %0 = vector.broadcast %cst : f32 to vector<432x128xf32>
    %c0 = arith.constant 0 : index
    %c0_0 = arith.constant 0 : index
    %c2 = arith.constant 2 : index
    %c0_1 = arith.constant 0 : index
    %c0_2 = arith.constant 0 : index
    %1 = vector.load %arg4[%c0, %c0_0, %c2, %c0_1, %c0_2] : memref<1x1x20x24x12xf32, #tpu.memory_space<vmem>>, vector<1x1x18x24x12xf32>
    %2 = vector.shape_cast %1 : vector<1x1x18x24x12xf32> to vector<18x24x12xf32>
    %3 = vector.shape_cast %2 : vector<18x24x12xf32> to vector<432x12xf32>
    %c0_3 = arith.constant 0 : index
    %c0_4 = arith.constant 0 : index
    %c0_5 = arith.constant 0 : index
    %c0_6 = arith.constant 0 : index
    %4 = vector.load %arg5[%c0_3, %c0_4, %c0_5, %c0_6] : memref<1x3x12x128xf32, #tpu.memory_space<vmem>>, vector<1x1x12x128xf32>
    %5 = vector.shape_cast %4 : vector<1x1x12x128xf32> to vector<12x128xf32>
    %cst_7 = arith.constant dense<0.000000e+00> : vector<432x128xf32>
    %6 = tpu.matmul %3, %5, %cst_7 {dimension_numbers = #tpu.dot_dimension_numbers<[1], [0], [0], [1], [0, 0, 1, 1], [], []>} : vector<432x12xf32>, vector<12x128xf32>, vector<432x128xf32> -> vector<432x128xf32>
    %7 = arith.addf %0, %6 : vector<432x128xf32>
    %c0_8 = arith.constant 0 : index
    %c0_9 = arith.constant 0 : index
    %c1 = arith.constant 1 : index
    %c0_10 = arith.constant 0 : index
    %c0_11 = arith.constant 0 : index
    %8 = vector.load %arg4[%c0_8, %c0_9, %c1, %c0_10, %c0_11] : memref<1x1x20x24x12xf32, #tpu.memory_space<vmem>>, vector<1x1x18x24x12xf32>
    %9 = vector.shape_cast %8 : vector<1x1x18x24x12xf32> to vector<18x24x12xf32>
    %10 = vector.shape_cast %9 : vector<18x24x12xf32> to vector<432x12xf32>
    %c0_12 = arith.constant 0 : index
    %c1_13 = arith.constant 1 : index
    %c0_14 = arith.constant 0 : index
    %c0_15 = arith.constant 0 : index
    %11 = vector.load %arg5[%c0_12, %c1_13, %c0_14, %c0_15] : memref<1x3x12x128xf32, #tpu.memory_space<vmem>>, vector<1x1x12x128xf32>
    %12 = vector.shape_cast %11 : vector<1x1x12x128xf32> to vector<12x128xf32>
    %cst_16 = arith.constant dense<0.000000e+00> : vector<432x128xf32>
    %13 = tpu.matmul %10, %12, %cst_16 {dimension_numbers = #tpu.dot_dimension_numbers<[1], [0], [0], [1], [0, 0, 1, 1], [], []>} : vector<432x12xf32>, vector<12x128xf32>, vector<432x128xf32> -> vector<432x128xf32>
    %14 = arith.addf %7, %13 : vector<432x128xf32>
    %c0_17 = arith.constant 0 : index
    %c0_18 = arith.constant 0 : index
    %c0_19 = arith.constant 0 : index
    %c0_20 = arith.constant 0 : index
    %c0_21 = arith.constant 0 : index
    %15 = vector.load %arg4[%c0_17, %c0_18, %c0_19, %c0_20, %c0_21] : memref<1x1x20x24x12xf32, #tpu.memory_space<vmem>>, vector<1x1x18x24x12xf32>
    %16 = vector.shape_cast %15 : vector<1x1x18x24x12xf32> to vector<18x24x12xf32>
    %17 = vector.shape_cast %16 : vector<18x24x12xf32> to vector<432x12xf32>
    %c0_22 = arith.constant 0 : index
    %c2_23 = arith.constant 2 : index
    %c0_24 = arith.constant 0 : index
    %c0_25 = arith.constant 0 : index
    %18 = vector.load %arg5[%c0_22, %c2_23, %c0_24, %c0_25] : memref<1x3x12x128xf32, #tpu.memory_space<vmem>>, vector<1x1x12x128xf32>
    %19 = vector.shape_cast %18 : vector<1x1x12x128xf32> to vector<12x128xf32>
    %cst_26 = arith.constant dense<0.000000e+00> : vector<432x128xf32>
    %20 = tpu.matmul %17, %19, %cst_26 {dimension_numbers = #tpu.dot_dimension_numbers<[1], [0], [0], [1], [0, 0, 1, 1], [], []>} : vector<432x12xf32>, vector<12x128xf32>, vector<432x128xf32> -> vector<432x128xf32>
    %21 = arith.addf %14, %20 : vector<432x128xf32>
    %c0_27 = arith.constant 0 : index
    %c0_28 = arith.constant 0 : index
    %22 = vector.load %arg6[%c0_27, %c0_28] : memref<1x128xf32, #tpu.memory_space<vmem>>, vector<1x128xf32>
    %23 = vector.broadcast %22 : vector<1x128xf32> to vector<432x128xf32>
    %24 = arith.addf %21, %23 : vector<432x128xf32>
    %25 = vector.shape_cast %24 : vector<432x128xf32> to vector<18x24x128xf32>
    %c0_29 = arith.constant 0 : index
    %c0_30 = arith.constant 0 : index
    %c0_31 = arith.constant 0 : index
    %c0_32 = arith.constant 0 : index
    %c0_33 = arith.constant 0 : index
    %26 = vector.load %arg7[%c0_29, %c0_30, %c0_31, %c0_32, %c0_33] : memref<1x1x18x24x128xf32, #tpu.memory_space<vmem>>, vector<1x1x18x24x128xf32>
    %27 = vector.shape_cast %26 : vector<1x1x18x24x128xf32> to vector<18x24x128xf32>
    %28 = vector.shape_cast %25 : vector<18x24x128xf32> to vector<1x1x18x24x128xf32>
    tpu.vector_store %arg7[%c0_29, %c0_30, %c0_31, %c0_32, %c0_33], %28 {strides = array<i32>} : memref<1x1x18x24x128xf32, #tpu.memory_space<vmem>>, vector<1x1x18x24x128xf32>,
    return
  }
  func.func @transform_0(%arg0: i32, %arg1: i32, %arg2: i32, %arg3: i32) -> (i32, i32, i32, i32, i32) {
    %c0_i32 = arith.constant 0 : i32
    %c0_i32_0 = arith.constant 0 : i32
    %c0_i32_1 = arith.constant 0 : i32
    %c0_i32_2 = arith.constant 0 : i32
    return %arg0, %arg1, %c0_i32, %c0_i32_0, %c0_i32_1 : i32, i32, i32, i32, i32
  }
  func.func @transform_1(%arg0: i32, %arg1: i32, %arg2: i32, %arg3: i32) -> (i32, i32, i32, i32) {
    %c0_i32 = arith.constant 0 : i32
    %c0_i32_0 = arith.constant 0 : i32
    %c0_i32_1 = arith.constant 0 : i32
    return %arg2, %c0_i32, %c0_i32_0, %arg3 : i32, i32, i32, i32
  }
  func.func @transform_2(%arg0: i32, %arg1: i32, %arg2: i32, %arg3: i32) -> (i32, i32) {
    %c0_i32 = arith.constant 0 : i32
    %c0_i32_0 = arith.constant 0 : i32
    return %c0_i32, %arg3 : i32, i32
  }
  func.func @transform_3(%arg0: i32, %arg1: i32, %arg2: i32, %arg3: i32) -> (i32, i32, i32, i32, i32) {
    %c0_i32 = arith.constant 0 : i32
    %c0_i32_0 = arith.constant 0 : i32
    return %arg2, %arg0, %arg1, %c0_i32, %arg3 : i32, i32, i32, i32, i32
  }
}

</mosaic_0001>

<llo_original>
// kernel: tpu_custom_call.1
$region0: #{tpu_custom_call.1}
  #allocation0 [shape = 'u32[]', space=smem, size = 0x4, offset = 0x4, fixed_abs, tag = 'smem constant byte address 0x4 - core index']
  #allocation1 [shape = 'u32[144,128]{1,0:T(1,128)}', space=vmem, size = 0x12000, scoped, tag = 'internal scratch']
  %s0 = inlined_call_operand.vmem [shape: f32[2,1,20,24,12], index: 0, kind: input, shape index: {}]
  %s1 = inlined_call_operand.vmem [shape: f32[4,3,12,128], index: 1, kind: input, shape index: {}]
  %s2 = inlined_call_operand.hbm [shape: f32[1,128], index: 2, kind: input, shape index: {}]
  %s3 = inlined_call_operand.hbm [shape: f32[4,2,18,24,128], index: 3, kind: output, shape index: {}]
  %s4 = sld [smem:[#allocation0]]
  $region49: #{tpu_custom_call.1} parent=0
    _
  %s6 = ssub.s32 1, %s4
  %s7 = scalar_select 0, %s6, %s4
  $region1: #{tpu_custom_call.1} parent=0
    #allocation2 [shape = 'u8[512]{0}', space=vmem, size = 0x400, scoped, tag = 'input window, operand 2, single buffered']
    #allocation3 [shape = 's32[2]{0}', space=sflag, size = 0x8, scoped, tag = 'scoped memory for tpu_custom_call.1']
    #allocation4 [shape = 's32[2]{0}', space=sflag, size = 0x8, scoped, tag = 'scoped memory for tpu_custom_call.1']
    #allocation5 [shape = 'u8[442368]{0}', space=vmem, size = 0x6c000, scoped, tag = 'output window, operand 0']
    %8 = vsyncpa [#allocation3], 0
    %9 = vsyncpa [#allocation4], 0
    %s10 = scalar_lea.sflag [#allocation4], 1
    %11 = vsyncpa %s10, 0
    loop: start=0, step=1, limit=10
    $region2: #{tpu_custom_call.1} parent=1 // loop_pre_header
      _
    $region3: #{tpu_custom_call.1} parent=1 // loop_header
      %s13 = sphi 0, %s17
      %p14 = scmp.ge.s32.totalorder %s13, 10
      %s20 = sphi 0, %s46
      %s21 = sphi 0, %s42
      %s22 = sphi 0, %s38
      %s23 = sphi 0, %s34
      %s24 = sphi 0, %s20
      %s25 = sphi 0, %s21
      %s26 = sphi 0, %s22
      %s27 = sphi 0, %s23
      %s28 = sphi 0, %s24
      %s29 = sphi 0, %s25
      %s30 = sphi 0, %s26
      %s31 = sphi 0, %s27
      %s51 = sphi 0, %s53
      %s54 = sphi 0, %s51
      %s55 = sphi 0, %s54
      %s71 = sphi 0, %s55
      %s79 = sphi 0, %s81
      %s82 = sphi 0, %s79
      %s83 = sphi 0, %s82
      %s99 = sphi 0, %s83
      %s105 = sphi 0, %s107
      %s108 = sphi 0, %s105
      %s109 = sphi 0, %s108
      %s125 = sphi 0, %s109
      %s137 = sphi 0, %s139
      %s140 = sphi 0, %s137
      %s141 = sphi 0, %s140
      %s157 = sphi 0, %s141
    $region4: #{tpu_custom_call.1} parent=1 // loop_header_branch
      %16 = sbr.rel (%p14) target = $region8
    $region5: #{tpu_custom_call.1} parent=1 // loop_body
      %s18 = ssub.s32 %s13, 1
      %s19 = ssub.s32 %s13, 2
      %s32 = sadd.s32 1, %s23
      %p33 = scmp.ge.s32.totalorder %s32, 1
      %s34 = scalar_select %p33, 0, %s32
      %s35 = sadd.s32 1, %s22
      %s36 = scalar_select %p33, %s35, %s22
      %p37 = scmp.ge.s32.totalorder %s36, 4
      %s38 = scalar_select %p37, 0, %s36
      %s39 = sadd.s32 1, %s21
      %s40 = scalar_select %p37, %s39, %s21
      %p41 = scmp.ge.s32.totalorder %s40, 1
      %s42 = scalar_select %p41, 0, %s40
      %s43 = sadd.s32 1, %s20
      %s44 = scalar_select %p41, %s43, %s20
      %p45 = scmp.ge.s32.totalorder %s44, 2
      %s46 = scalar_select %p45, 0, %s44
      %s47 = ssub.s32 %s20, %s46
      %s48 = ssub.s32 %s21, %s42
      %s49 = sor.u32 %s47, %s48
      %p50 = scmp.eq.s32.totalorder %s49, 0
      %s52 = sadd.s32 %s51, 1
      %s53 = scalar_select %p50, %s51, %s52
      %p56 = pneg %p50
      %p57 = scmp.eq.s32.totalorder %s13, 7
      %p58 = por %p56, %p57
      %p59 = scmp.ne.s32.totalorder %s51, %s54
      %p60 = scmp.eq.s32.totalorder %s13, 0
      %p61 = por %p59, %p60
      %p62 = scmp.ne.s32.totalorder %s51, %s54
      %p63 = scmp.eq.s32.totalorder %s18, 7
      %p64 = por %p62, %p63
      %p65 = scmp.ne.s32.totalorder %s54, %s55
      %p66 = scmp.eq.s32.totalorder %s18, 0
      %p67 = por %p65, %p66
      %p68 = scmp.ne.s32.totalorder %s54, %s55
      %p69 = scmp.eq.s32.totalorder %s19, 7
      %p70 = por %p68, %p69
      %p72 = scmp.ne.s32.totalorder %s55, %s71
      %p73 = scmp.eq.s32.totalorder %s19, 0
      %p74 = por %p72, %p73
      %s75 = ssub.s32 %s22, %s38
      %s76 = ssub.s32 %s23, %s34
      %s77 = sor.u32 %s75, %s76
      %p78 = scmp.eq.s32.totalorder %s77, 0
      %s80 = sadd.s32 %s79, 1
      %s81 = scalar_select %p78, %s79, %s80
      %p84 = pneg %p78
      %p85 = scmp.eq.s32.totalorder %s13, 7
      %p86 = por %p84, %p85
      %p87 = scmp.ne.s32.totalorder %s79, %s82
      %p88 = scmp.eq.s32.totalorder %s13, 0
      %p89 = por %p87, %p88
      %p90 = scmp.ne.s32.totalorder %s79, %s82
      %p91 = scmp.eq.s32.totalorder %s18, 7
      %p92 = por %p90, %p91
      %p93 = scmp.ne.s32.totalorder %s82, %s83
      %p94 = scmp.eq.s32.totalorder %s18, 0
      %p95 = por %p93, %p94
      %p96 = scmp.ne.s32.totalorder %s82, %s83
      %p97 = scmp.eq.s32.totalorder %s19, 7
      %p98 = por %p96, %p97
      %p100 = scmp.ne.s32.totalorder %s83, %s99
      %p101 = scmp.eq.s32.totalorder %s19, 0
      %p102 = por %p100, %p101
      %s103 = ssub.s32 %s23, %s34
      %p104 = scmp.eq.s32.totalorder %s103, 0
      %s106 = sadd.s32 %s105, 1
      %s107 = scalar_select %p104, %s105, %s106
      %p110 = pneg %p104
      %p111 = scmp.eq.s32.totalorder %s13, 7
      %p112 = por %p110, %p111
      %p113 = scmp.ne.s32.totalorder %s105, %s108
      %p114 = scmp.eq.s32.totalorder %s13, 0
      %p115 = por %p113, %p114
      %p116 = scmp.ne.s32.totalorder %s105, %s108
      %p117 = scmp.eq.s32.totalorder %s18, 7
      %p118 = por %p116, %p117
      %p119 = scmp.ne.s32.totalorder %s108, %s109
      %p120 = scmp.eq.s32.totalorder %s18, 0
      %p121 = por %p119, %p120
      %p122 = scmp.ne.s32.totalorder %s108, %s109
      %p123 = scmp.eq.s32.totalorder %s19, 7
      %p124 = por %p122, %p123
      %p126 = scmp.ne.s32.totalorder %s109, %s125
      %p127 = scmp.eq.s32.totalorder %s19, 0
      %p128 = por %p126, %p127
      %s129 = ssub.s32 %s22, %s38
      %s130 = ssub.s32 %s20, %s46
      %s131 = sor.u32 %s129, %s130
      %s132 = ssub.s32 %s21, %s42
      %s133 = sor.u32 %s131, %s132
      %s134 = ssub.s32 %s23, %s34
      %s135 = sor.u32 %s133, %s134
      %p136 = scmp.eq.s32.totalorder %s135, 0
      %s138 = sadd.s32 %s137, 1
      %s139 = scalar_select %p136, %s137, %s138
      %p142 = pneg %p136
      %p143 = scmp.eq.s32.totalorder %s13, 7
      %p144 = por %p142, %p143
      %p145 = scmp.ne.s32.totalorder %s137, %s140
      %p146 = scmp.eq.s32.totalorder %s13, 0
      %p147 = por %p145, %p146
      %p148 = scmp.ne.s32.totalorder %s137, %s140
      %p149 = scmp.eq.s32.totalorder %s18, 7
      %p150 = por %p148, %p149
      %p151 = scmp.ne.s32.totalorder %s140, %s141
      %p152 = scmp.eq.s32.totalorder %s18, 0
      %p153 = por %p151, %p152
      %p154 = scmp.ne.s32.totalorder %s140, %s141
      %p155 = scmp.eq.s32.totalorder %s19, 7
      %p156 = por %p154, %p155
      %p158 = scmp.ne.s32.totalorder %s141, %s157
      %p159 = scmp.eq.s32.totalorder %s19, 0
      %p160 = por %p158, %p159
      %p161 = scmp.le.s32.totalorder 1, %s13
      %p162 = scmp.lt.s32.totalorder %s13, 9
      %p163 = pnand %p161, %p162
      %p164 = pneg %p163
      // Predicated region
      $region9: #{tpu_custom_call.1} parent=5 // pred_check
        _
      $region10: #{tpu_custom_call.1} parent=5 // pred_check_branch
        %166 = sbr.rel (%p163) target = $region12
      $region11: #{tpu_custom_call.1} parent=5 // pred_region
        %s167 = ssub.s32 %s13, 1
        // Predicated region
        $region13: #{tpu_custom_call.1} parent=11 // pred_check
          %p168 = pneg %p121
        $region14: #{tpu_custom_call.1} parent=11 // pred_check_branch
          %170 = sbr.rel (%p168) target = $region16
        $region15: #{tpu_custom_call.1} parent=11 // pred_region
          %s172 = ssub.s32 16, 16
          %173 = vsyncadd [#allocation3], %s172
          %s174 = smul.addr %s27, 16
          %s175 = scalar_lea.hbm %s2, %s174
          %s177 = sshll.u32 [#allocation2], 4
          %s178 = int_to_ptr.vmem [resolvable:$true] %s177
          %180 = dma.hbm_to_vmem [thread:$0]  %s175, 16, %s178, [#allocation3]
        $region16: #{tpu_custom_call.1} parent=11 // pred_fallthru
          _
      $region12: #{tpu_custom_call.1} parent=5 // pred_fallthru
        _
      %p181 = scmp.lt.s32.totalorder %s13, 8
      // Predicated region
      $region17: #{tpu_custom_call.1} parent=5 // pred_check
        %p182 = pneg %p181
      $region18: #{tpu_custom_call.1} parent=5 // pred_check_branch
        %184 = sbr.rel (%p182) target = $region20
      $region19: #{tpu_custom_call.1} parent=5 // pred_region
        // Predicated region
        $region21: #{tpu_custom_call.1} parent=19 // pred_check
          %p185 = pneg %p61
        $region22: #{tpu_custom_call.1} parent=19 // pred_check_branch
          %187 = sbr.rel (%p185) target = $region24
        $region23: #{tpu_custom_call.1} parent=19 // pred_region
          %p188 = scmp.lt.s32.totalorder %s20, 1
          %s189 = scalar_select %p188, %s20, 1
          %p190 = scmp.lt.s32.totalorder %s21, 0
          %s191 = scalar_select %p190, %s21, 0
          %s192 = smul.addr %s191, 60
          %s193 = smul.addr %s189, 60
          %s194 = sadd.s32 %s192, %s193
          %s195 = smul.addr %s194, 8
          %s196 = scalar_lea.vmem %s0, %s195
        $region24: #{tpu_custom_call.1} parent=19 // pred_fallthru
          _
        // Predicated region
        $region25: #{tpu_custom_call.1} parent=19 // pred_check
          %p197 = pneg %p89
        $region26: #{tpu_custom_call.1} parent=19 // pred_check_branch
          %199 = sbr.rel (%p197) target = $region28
        $region27: #{tpu_custom_call.1} parent=19 // pred_region
          %p200 = scmp.lt.s32.totalorder %s22, 3
          %s201 = scalar_select %p200, %s22, 3
          %p202 = scmp.lt.s32.totalorder %s23, 0
          %s203 = scalar_select %p202, %s23, 0
          %s204 = smul.addr %s201, 6
          %s205 = sadd.s32 %s203, %s204
          %s206 = smul.addr %s205, 8
          %s207 = scalar_lea.vmem %s1, %s206
        $region28: #{tpu_custom_call.1} parent=19 // pred_fallthru
          _
      $region20: #{tpu_custom_call.1} parent=5 // pred_fallthru
        _
      %p208 = scmp.le.s32.totalorder 1, %s13
      %p209 = scmp.lt.s32.totalorder %s13, 9
      %p210 = pnand %p208, %p209
      %p211 = pneg %p210
      // Predicated region
      $region29: #{tpu_custom_call.1} parent=5 // pred_check
        _
      $region30: #{tpu_custom_call.1} parent=5 // pred_check_branch
        %213 = sbr.rel (%p210) target = $region32
      $region31: #{tpu_custom_call.1} parent=5 // pred_region
        %s214 = ssub.s32 %s13, 1
        // Predicated region
        $region33: #{tpu_custom_call.1} parent=31 // pred_check
          %p215 = pneg %p121
        $region34: #{tpu_custom_call.1} parent=31 // pred_check_branch
          %217 = sbr.rel (%p215) target = $region36
        $region35: #{tpu_custom_call.1} parent=31 // pred_region
          %218 = dma.done [#allocation3], 16
        $region36: #{tpu_custom_call.1} parent=31 // pred_fallthru
          _
        %p219 = scmp.lt.s32.totalorder %s24, 1
        %s220 = scalar_select %p219, %s24, 1
        %p221 = scmp.lt.s32.totalorder %s25, 0
        %s222 = scalar_select %p221, %s25, 0
        %s223 = smul.addr %s222, 60
        %s224 = smul.addr %s220, 60
        %s225 = sadd.s32 %s223, %s224
        %s226 = smul.addr %s225, 8
        %s227 = scalar_lea.vmem %s0, %s226
        %p228 = pneg %p67
        %p229 = pneg %p64
        %p230 = scmp.lt.s32.totalorder %s26, 3
        %s231 = scalar_select %p230, %s26, 3
        %p232 = scmp.lt.s32.totalorder %s27, 0
        %s233 = scalar_select %p232, %s27, 0
        %s234 = smul.addr %s231, 6
        %s235 = sadd.s32 %s233, %s234
        %s236 = smul.addr %s235, 8
        %s237 = scalar_lea.vmem %s1, %s236
        %p238 = pneg %p95
        %p239 = pneg %p92
        %p240 = pneg %p121
        %p241 = pneg %p118
        %p242 = pneg %p153
        %p243 = pneg %p150
        %s244 = sand.u32 %s140, 1
        %s245 = scalar_lea.sflag [#allocation4], %s244
        %s246 = sand.u32 %s140, 1
        %s247 = smul.addr %s246, 432
        %s248 = scalar_lea.vmem [#allocation5], %s247
        %p249 = scmp.lt.s32.totalorder %s24, 1
        %s250 = scalar_select %p249, %s24, 1
        %p251 = scmp.lt.s32.totalorder %s25, 0
        %s252 = scalar_select %p251, %s25, 0
        %s253 = smul.addr %s252, 60
        %s254 = smul.addr %s250, 60
        %s255 = sadd.s32 %s253, %s254
        %s256 = smul.addr %s255, 8
        %s257 = scalar_lea.vmem %s0, %s256
        %p258 = scmp.lt.s32.totalorder %s26, 3
        %s259 = scalar_select %p258, %s26, 3
        %p260 = scmp.lt.s32.totalorder %s27, 0
        %s261 = scalar_select %p260, %s27, 0
        %s262 = smul.addr %s259, 6
        %s263 = sadd.s32 %s261, %s262
        %s264 = smul.addr %s263, 8
        %s265 = scalar_lea.vmem %s1, %s264
        %s266 = smul.u32 18, %s25
        %s267 = scalar_lea.vmem %s257, 48
        %v268 = vld [vmem:[%s267] sm:$0xff]
        %v269 = vld [vmem:[%s267 + $0x8] sm:$0xff]
        %v270 = vld [vmem:[%s267 + $0x10] sm:$0xff]
        %v271 = vld [vmem:[%s267 + $0x18] sm:$0xff]
        %v272 = vld [vmem:[%s267 + $0x20] sm:$0xff]
        %v273 = vld [vmem:[%s267 + $0x28] sm:$0xff]
        %v274 = vld [vmem:[%s267 + $0x30] sm:$0xff]
        %v275 = vld [vmem:[%s267 + $0x38] sm:$0xff]
        %v276 = vld [vmem:[%s267 + $0x40] sm:$0xff]
        %v277 = vld [vmem:[%s267 + $0x48] sm:$0xff]
        %v278 = vld [vmem:[%s267 + $0x50] sm:$0xff]
        %v279 = vld [vmem:[%s267 + $0x58] sm:$0xff]
        %v280 = vld [vmem:[%s267 + $0x60] sm:$0xff]
        %v281 = vld [vmem:[%s267 + $0x68] sm:$0xff]
        %v282 = vld [vmem:[%s267 + $0x70] sm:$0xff]
        %v283 = vld [vmem:[%s267 + $0x78] sm:$0xff]
        %v284 = vld [vmem:[%s267 + $0x80] sm:$0xff]
        %v285 = vld [vmem:[%s267 + $0x88] sm:$0xff]
        %v286 = vld [vmem:[%s267 + $0x90] sm:$0xff]
        %v287 = vld [vmem:[%s267 + $0x98] sm:$0xff]
        %v288 = vld [vmem:[%s267 + $0xa0] sm:$0xff]
        %v289 = vld [vmem:[%s267 + $0xa8] sm:$0xff]
        %v290 = vld [vmem:[%s267 + $0xb0] sm:$0xff]
        %v291 = vld [vmem:[%s267 + $0xb8] sm:$0xff]
        %v292 = vld [vmem:[%s267 + $0xc0] sm:$0xff]
        %v293 = vld [vmem:[%s267 + $0xc8] sm:$0xff]
        %v294 = vld [vmem:[%s267 + $0xd0] sm:$0xff]
        %v295 = vld [vmem:[%s267 + $0xd8] sm:$0xff]
        %v296 = vld [vmem:[%s267 + $0xe0] sm:$0xff]
        %v297 = vld [vmem:[%s267 + $0xe8] sm:$0xff]
        %v298 = vld [vmem:[%s267 + $0xf0] sm:$0xff]
        %v299 = vld [vmem:[%s267 + $0xf8] sm:$0xff]
        %v300 = vld [vmem:[%s267 + $0x100] sm:$0xff]
        %v301 = vld [vmem:[%s267 + $0x108] sm:$0xff]
        %v302 = vld [vmem:[%s267 + $0x110] sm:$0xff]
        %v303 = vld [vmem:[%s267 + $0x118] sm:$0xff]
        %v304 = vld [vmem:[%s267 + $0x120] sm:$0xff]
        %v305 = vld [vmem:[%s267 + $0x128] sm:$0xff]
        %v306 = vld [vmem:[%s267 + $0x130] sm:$0xff]
        %v307 = vld [vmem:[%s267 + $0x138] sm:$0xff]
        %v308 = vld [vmem:[%s267 + $0x140] sm:$0xff]
        %v309 = vld [vmem:[%s267 + $0x148] sm:$0xff]
        %v310 = vld [vmem:[%s267 + $0x150] sm:$0xff]
        %v311 = vld [vmem:[%s267 + $0x158] sm:$0xff]
        %v312 = vld [vmem:[%s267 + $0x160] sm:$0xff]
        %v313 = vld [vmem:[%s267 + $0x168] sm:$0xff]
        %v314 = vld [vmem:[%s267 + $0x170] sm:$0xff]
        %v315 = vld [vmem:[%s267 + $0x178] sm:$0xff]
        %v316 = vld [vmem:[%s267 + $0x180] sm:$0xff]
        %v317 = vld [vmem:[%s267 + $0x188] sm:$0xff]
        %v318 = vld [vmem:[%s267 + $0x190] sm:$0xff]
        %v319 = vld [vmem:[%s267 + $0x198] sm:$0xff]
        %v320 = vld [vmem:[%s267 + $0x1a0] sm:$0xff]
        %v321 = vld [vmem:[%s267 + $0x1a8] sm:$0xff]
        %v322 = vld [vmem:[%s265] sm:$0xff]
        %v323 = vld [vmem:[%s265 + $0x8] sm:$0xf]
        %s324 = scalar_lea.vmem %s257, 24
        %v325 = vld [vmem:[%s324] sm:$0xff]
        %v326 = vld [vmem:[%s324 + $0x8] sm:$0xff]
        %v327 = vld [vmem:[%s324 + $0x10] sm:$0xff]
        %v328 = vld [vmem:[%s324 + $0x18] sm:$0xff]
        %v329 = vld [vmem:[%s324 + $0x20] sm:$0xff]
        %v330 = vld [vmem:[%s324 + $0x28] sm:$0xff]
        %v331 = vld [vmem:[%s324 + $0x30] sm:$0xff]
        %v332 = vld [vmem:[%s324 + $0x38] sm:$0xff]
        %v333 = vld [vmem:[%s324 + $0x40] sm:$0xff]
        %v334 = vld [vmem:[%s324 + $0x48] sm:$0xff]
        %v335 = vld [vmem:[%s324 + $0x50] sm:$0xff]
        %v336 = vld [vmem:[%s324 + $0x58] sm:$0xff]
        %v337 = vld [vmem:[%s324 + $0x60] sm:$0xff]
        %v338 = vld [vmem:[%s324 + $0x68] sm:$0xff]
        %v339 = vld [vmem:[%s324 + $0x70] sm:$0xff]
        %v340 = vld [vmem:[%s324 + $0x78] sm:$0xff]
        %v341 = vld [vmem:[%s324 + $0x80] sm:$0xff]
        %v342 = vld [vmem:[%s324 + $0x88] sm:$0xff]
        %v343 = vld [vmem:[%s324 + $0x90] sm:$0xff]
        %v344 = vld [vmem:[%s324 + $0x98] sm:$0xff]
        %v345 = vld [vmem:[%s324 + $0xa0] sm:$0xff]
        %v346 = vld [vmem:[%s324 + $0xa8] sm:$0xff]
        %v347 = vld [vmem:[%s324 + $0xb0] sm:$0xff]
        %v348 = vld [vmem:[%s324 + $0xb8] sm:$0xff]
        %v349 = vld [vmem:[%s324 + $0xc0] sm:$0xff]
        %v350 = vld [vmem:[%s324 + $0xc8] sm:$0xff]
        %v351 = vld [vmem:[%s324 + $0xd0] sm:$0xff]
        %v352 = vld [vmem:[%s324 + $0xd8] sm:$0xff]
        %v353 = vld [vmem:[%s324 + $0xe0] sm:$0xff]
        %v354 = vld [vmem:[%s324 + $0xe8] sm:$0xff]
        %v355 = vld [vmem:[%s324 + $0xf0] sm:$0xff]
        %v356 = vld [vmem:[%s324 + $0xf8] sm:$0xff]
        %v357 = vld [vmem:[%s324 + $0x100] sm:$0xff]
        %v358 = vld [vmem:[%s324 + $0x108] sm:$0xff]
        %v359 = vld [vmem:[%s324 + $0x110] sm:$0xff]
        %v360 = vld [vmem:[%s324 + $0x118] sm:$0xff]
        %v361 = vld [vmem:[%s324 + $0x120] sm:$0xff]
        %v362 = vld [vmem:[%s324 + $0x128] sm:$0xff]
        %v363 = vld [vmem:[%s324 + $0x130] sm:$0xff]
        %v364 = vld [vmem:[%s324 + $0x138] sm:$0xff]
        %v365 = vld [vmem:[%s324 + $0x140] sm:$0xff]
        %v366 = vld [vmem:[%s324 + $0x148] sm:$0xff]
        %v367 = vld [vmem:[%s324 + $0x150] sm:$0xff]
        %v368 = vld [vmem:[%s324 + $0x158] sm:$0xff]
        %v369 = vld [vmem:[%s324 + $0x160] sm:$0xff]
        %v370 = vld [vmem:[%s324 + $0x168] sm:$0xff]
        %v371 = vld [vmem:[%s324 + $0x170] sm:$0xff]
        %v372 = vld [vmem:[%s324 + $0x178] sm:$0xff]
        %v373 = vld [vmem:[%s324 + $0x180] sm:$0xff]
        %v374 = vld [vmem:[%s324 + $0x188] sm:$0xff]
        %v375 = vld [vmem:[%s324 + $0x190] sm:$0xff]
        %v376 = vld [vmem:[%s324 + $0x198] sm:$0xff]
        %v377 = vld [vmem:[%s324 + $0x1a0] sm:$0xff]
        %v378 = vld [vmem:[%s324 + $0x1a8] sm:$0xff]
        %s379 = scalar_lea.vmem %s265, 16
        %v380 = vld [vmem:[%s379] sm:$0xff]
        %v381 = vld [vmem:[%s379 + $0x8] sm:$0xf]
        %vm382 = vcmask 97280
        %v384 = vsel %vm382, %v325, 0
        %v387 = vsel %vm382, %v326, 0
        %v390 = vsel %vm382, %v327, 0
        %v393 = vsel %vm382, %v328, 0
        %v396 = vsel %vm382, %v329, 0
        %v399 = vsel %vm382, %v330, 0
        %v402 = vsel %vm382, %v331, 0
        %v405 = vsel %vm382, %v332, 0
        %v408 = vsel %vm382, %v333, 0
        %v411 = vsel %vm382, %v334, 0
        %v414 = vsel %vm382, %v335, 0
        %v417 = vsel %vm382, %v336, 0
        %v420 = vsel %vm382, %v337, 0
        %v423 = vsel %vm382, %v338, 0
        %v426 = vsel %vm382, %v339, 0
        %v429 = vsel %vm382, %v340, 0
        %v432 = vsel %vm382, %v341, 0
        %v435 = vsel %vm382, %v342, 0
        %v438 = vsel %vm382, %v343, 0
        %v441 = vsel %vm382, %v344, 0
        %v444 = vsel %vm382, %v345, 0
        %v447 = vsel %vm382, %v346, 0
        %v450 = vsel %vm382, %v347, 0
        %v453 = vsel %vm382, %v348, 0
        %v456 = vsel %vm382, %v349, 0
        %v459 = vsel %vm382, %v350, 0
        %v462 = vsel %vm382, %v351, 0
        %v465 = vsel %vm382, %v352, 0
        %v468 = vsel %vm382, %v353, 0
        %v471 = vsel %vm382, %v354, 0
        %v474 = vsel %vm382, %v355, 0
        %v477 = vsel %vm382, %v356, 0
        %v480 = vsel %vm382, %v357, 0
        %v483 = vsel %vm382, %v358, 0
        %v486 = vsel %vm382, %v359, 0
        %v489 = vsel %vm382, %v360, 0
        %v492 = vsel %vm382, %v361, 0
        %v495 = vsel %vm382, %v362, 0
        %v498 = vsel %vm382, %v363, 0
        %v501 = vsel %vm382, %v364, 0
        %v504 = vsel %vm382, %v365, 0
        %v507 = vsel %vm382, %v366, 0
        %v510 = vsel %vm382, %v367, 0
        %v513 = vsel %vm382, %v368, 0
        %v516 = vsel %vm382, %v369, 0
        %v519 = vsel %vm382, %v370, 0
        %v522 = vsel %vm382, %v371, 0
        %v525 = vsel %vm382, %v372, 0
        %v528 = vsel %vm382, %v373, 0
        %v531 = vsel %vm382, %v374, 0
        %v534 = vsel %vm382, %v375, 0
        %v537 = vsel %vm382, %v376, 0
        %v540 = vsel %vm382, %v377, 0
        %v543 = vsel %vm382, %v378, 0
        %vm545 = vcmask 1043456
        %v547 = vsel %vm545, %v381, 0
        %549 = vmatprep.subr.mxu0 0.0
        %550 = vmatpush1.msra.mxu0 0.0
        %551 = vmatprep.subr.mxu0 0.0
        %552 = vmatpush1.msra.mxu0 0.0
        %553 = vmatprep.subr.mxu0 0.0
        %554 = vmatpush1.msra.mxu0 0.0
        %555 = vmatprep.subr.mxu0 0.0
        %556 = vmatpush1.msra.mxu0 0.0
        %557 = vmatprep.subr.mxu0 0.0
        %558 = vmatpush1.msra.mxu0 0.0
        %559 = vmatprep.subr.mxu0 0.0
        %560 = vmatpush1.msra.mxu0 0.0
        %561 = vmatprep.subr.mxu0 0.0
        %562 = vmatpush1.msra.mxu0 0.0
        %563 = vmatprep.subr.mxu0 0.0
        %564 = vmatpush1.msra.mxu0 0.0
        %565 = vmatprep.subr.mxu0 0.0
        %566 = vmatpush1.msra.mxu0 0.0
        %567 = vmatprep.subr.mxu0 0.0
        %568 = vmatpush1.msra.mxu0 0.0
        %569 = vmatprep.subr.mxu0 0.0
        %570 = vmatpush1.msra.mxu0 0.0
        %571 = vmatprep.subr.mxu0 0.0
        %572 = vmatpush1.msra.mxu0 0.0
        %573 = vmatprep.subr.mxu0 0.0
        %574 = vmatpush1.msra.mxu0 0.0
        %575 = vmatprep.subr.mxu0 0.0
        %576 = vmatpush1.msra.mxu0 0.0
        %577 = vmatprep.subr.mxu0 0.0
        %578 = vmatpush1.msra.mxu0 %v547
        %579 = vmatprep.subr.mxu0 0.0
        %580 = vmatpush1.msra.mxu0 %v380
        %581 = vmatprep.subr.mxu0 0.0
        %582 = vmatpush2.msra.mxu0 0.0
        %583 = vmatprep.subr.mxu0 0.0
        %584 = vmatpush2.msra.mxu0 0.0
        %585 = vmatprep.subr.mxu0 0.0
        %586 = vmatpush2.msra.mxu0 0.0
        %587 = vmatprep.subr.mxu0 0.0
        %588 = vmatpush2.msra.mxu0 0.0
        %589 = vmatprep.subr.mxu0 0.0
        %590 = vmatpush2.msra.mxu0 0.0
        %591 = vmatprep.subr.mxu0 0.0
        %592 = vmatpush2.msra.mxu0 0.0
        %593 = vmatprep.subr.mxu0 0.0
        %594 = vmatpush2.msra.mxu0 0.0
        %595 = vmatprep.subr.mxu0 0.0
        %596 = vmatpush2.msra.mxu0 0.0
        %597 = vmatprep.subr.mxu0 0.0
        %598 = vmatpush2.msra.mxu0 0.0
        %599 = vmatprep.subr.mxu0 0.0
        %600 = vmatpush2.msra.mxu0 0.0
        %601 = vmatprep.subr.mxu0 0.0
        %602 = vmatpush2.msra.mxu0 0.0
        %603 = vmatprep.subr.mxu0 0.0
        %604 = vmatpush2.msra.mxu0 0.0
        %605 = vmatprep.subr.mxu0 0.0
        %606 = vmatpush2.msra.mxu0 0.0
        %607 = vmatprep.subr.mxu0 0.0
        %608 = vmatpush2.msra.mxu0 0.0
        %609 = vmatprep.subr.mxu0 0.0
        %610 = vmatpush2.msra.mxu0 0.0
        %611 = vmatprep.subr.mxu0 0.0
        %612 = vmatpush2.msra.mxu0 0.0
        %613 = vmatprep.mubr.f32.mxu0 0.0
        %614 = vmatmul.mubr.f32.gmra.mxu0 %v384
        %v615 = vpop.f32.mrf.mxu0
        %v616 = vadd.f32 0.0, %v615
        %v617 = vpop.f32.mrf.mxu0
        %618 = vmatprep.mubr.f32.mxu0 0.0
        %619 = vmatmul.mubr.f32.gmra.mxu0 %v387
        %v620 = vpop.f32.mrf.mxu0
        %v621 = vadd.f32 0.0, %v620
        %v622 = vpop.f32.mrf.mxu0
        %623 = vmatprep.mubr.f32.mxu0 0.0
        %624 = vmatmul.mubr.f32.gmra.mxu0 %v390
        %v625 = vpop.f32.mrf.mxu0
        %v626 = vadd.f32 0.0, %v625
        %v627 = vpop.f32.mrf.mxu0
        %628 = vmatprep.mubr.f32.mxu0 0.0
        %629 = vmatmul.mubr.f32.gmra.mxu0 %v393
        %v630 = vpop.f32.mrf.mxu0
        %v631 = vadd.f32 0.0, %v630
        %v632 = vpop.f32.mrf.mxu0
        %633 = vmatprep.mubr.f32.mxu0 0.0
        %634 = vmatmul.mubr.f32.gmra.mxu0 %v396
        %v635 = vpop.f32.mrf.mxu0
        %v636 = vadd.f32 0.0, %v635
        %v637 = vpop.f32.mrf.mxu0
        %638 = vmatprep.mubr.f32.mxu0 0.0
        %639 = vmatmul.mubr.f32.gmra.mxu0 %v399
        %v640 = vpop.f32.mrf.mxu0
        %v641 = vadd.f32 0.0, %v640
        %v642 = vpop.f32.mrf.mxu0
        %643 = vmatprep.mubr.f32.mxu0 0.0
        %644 = vmatmul.mubr.f32.gmra.mxu0 %v402
        %v645 = vpop.f32.mrf.mxu0
        %v646 = vadd.f32 0.0, %v645
        %v647 = vpop.f32.mrf.mxu0
        %648 = vmatprep.mubr.f32.mxu0 0.0
        %649 = vmatmul.mubr.f32.gmra.mxu0 %v405
        %v650 = vpop.f32.mrf.mxu0
        %v651 = vadd.f32 0.0, %v650
        %v652 = vpop.f32.mrf.mxu0
        %653 = vmatprep.mubr.f32.mxu0 0.0
        %654 = vmatmul.mubr.f32.gmra.mxu0 %v408
        %v655 = vpop.f32.mrf.mxu0
        %v656 = vadd.f32 0.0, %v655
        %v657 = vpop.f32.mrf.mxu0
        %658 = vmatprep.mubr.f32.mxu0 0.0
        %659 = vmatmul.mubr.f32.gmra.mxu0 %v411
        %v660 = vpop.f32.mrf.mxu0
        %v661 = vadd.f32 0.0, %v660
        %v662 = vpop.f32.mrf.mxu0
        %663 = vmatprep.mubr.f32.mxu0 0.0
        %664 = vmatmul.mubr.f32.gmra.mxu0 %v414
        %v665 = vpop.f32.mrf.mxu0
        %v666 = vadd.f32 0.0, %v665
        %v667 = vpop.f32.mrf.mxu0
        %668 = vmatprep.mubr.f32.mxu0 0.0
        %669 = vmatmul.mubr.f32.gmra.mxu0 %v417
        %v670 = vpop.f32.mrf.mxu0
        %v671 = vadd.f32 0.0, %v670
        %v672 = vpop.f32.mrf.mxu0
        %673 = vmatprep.mubr.f32.mxu0 0.0
        %674 = vmatmul.mubr.f32.gmra.mxu0 %v420
        %v675 = vpop.f32.mrf.mxu0
        %v676 = vadd.f32 0.0, %v675
        %v677 = vpop.f32.mrf.mxu0
        %678 = vmatprep.mubr.f32.mxu0 0.0
        %679 = vmatmul.mubr.f32.gmra.mxu0 %v423
        %v680 = vpop.f32.mrf.mxu0
        %v681 = vadd.f32 0.0, %v680
        %v682 = vpop.f32.mrf.mxu0
        %683 = vmatprep.mubr.f32.mxu0 0.0
        %684 = vmatmul.mubr.f32.gmra.mxu0 %v426
        %v685 = vpop.f32.mrf.mxu0
        %v686 = vadd.f32 0.0, %v685
        %v687 = vpop.f32.mrf.mxu0
        %688 = vmatprep.mubr.f32.mxu0 0.0
        %689 = vmatmul.mubr.f32.gmra.mxu0 %v429
        %v690 = vpop.f32.mrf.mxu0
        %v691 = vadd.f32 0.0, %v690
        %v692 = vpop.f32.mrf.mxu0
        %693 = vmatprep.mubr.f32.mxu0 0.0
        %694 = vmatmul.mubr.f32.gmra.mxu0 %v432
        %v695 = vpop.f32.mrf.mxu0
        %v696 = vadd.f32 0.0, %v695
        %v697 = vpop.f32.mrf.mxu0
        %698 = vmatprep.mubr.f32.mxu0 0.0
        %699 = vmatmul.mubr.f32.gmra.mxu0 %v435
        %v700 = vpop.f32.mrf.mxu0
        %v701 = vadd.f32 0.0, %v700
        %v702 = vpop.f32.mrf.mxu0
        %703 = vmatprep.mubr.f32.mxu0 0.0
        %704 = vmatmul.mubr.f32.gmra.mxu0 %v438
        %v705 = vpop.f32.mrf.mxu0
        %v706 = vadd.f32 0.0, %v705
        %v707 = vpop.f32.mrf.mxu0
        %708 = vmatprep.mubr.f32.mxu0 0.0
        %709 = vmatmul.mubr.f32.gmra.mxu0 %v441
        %v710 = vpop.f32.mrf.mxu0
        %v711 = vadd.f32 0.0, %v710
        %v712 = vpop.f32.mrf.mxu0
        %713 = vmatprep.mubr.f32.mxu0 0.0
        %714 = vmatmul.mubr.f32.gmra.mxu0 %v444
        %v715 = vpop.f32.mrf.mxu0
        %v716 = vadd.f32 0.0, %v715
        %v717 = vpop.f32.mrf.mxu0
        %718 = vmatprep.mubr.f32.mxu0 0.0
        %719 = vmatmul.mubr.f32.gmra.mxu0 %v447
        %v720 = vpop.f32.mrf.mxu0
        %v721 = vadd.f32 0.0, %v720
        %v722 = vpop.f32.mrf.mxu0
        %723 = vmatprep.mubr.f32.mxu0 0.0
        %724 = vmatmul.mubr.f32.gmra.mxu0 %v450
        %v725 = vpop.f32.mrf.mxu0
        %v726 = vadd.f32 0.0, %v725
        %v727 = vpop.f32.mrf.mxu0
        %728 = vmatprep.mubr.f32.mxu0 0.0
        %729 = vmatmul.mubr.f32.gmra.mxu0 %v453
        %v730 = vpop.f32.mrf.mxu0
        %v731 = vadd.f32 0.0, %v730
        %v732 = vpop.f32.mrf.mxu0
        %733 = vmatprep.mubr.f32.mxu0 0.0
        %734 = vmatmul.mubr.f32.gmra.mxu0 %v456
        %v735 = vpop.f32.mrf.mxu0
        %v736 = vadd.f32 0.0, %v735
        %v737 = vpop.f32.mrf.mxu0
        %738 = vmatprep.mubr.f32.mxu0 0.0
        %739 = vmatmul.mubr.f32.gmra.mxu0 %v459
        %v740 = vpop.f32.mrf.mxu0
        %v741 = vadd.f32 0.0, %v740
        %v742 = vpop.f32.mrf.mxu0
        %743 = vmatprep.mubr.f32.mxu0 0.0
        %744 = vmatmul.mubr.f32.gmra.mxu0 %v462
        %v745 = vpop.f32.mrf.mxu0
        %v746 = vadd.f32 0.0, %v745
        %v747 = vpop.f32.mrf.mxu0
        %748 = vmatprep.mubr.f32.mxu0 0.0
        %749 = vmatmul.mubr.f32.gmra.mxu0 %v465
        %v750 = vpop.f32.mrf.mxu0
        %v751 = vadd.f32 0.0, %v750
        %v752 = vpop.f32.mrf.mxu0
        %753 = vmatprep.mubr.f32.mxu0 0.0
        %754 = vmatmul.mubr.f32.gmra.mxu0 %v468
        %v755 = vpop.f32.mrf.mxu0
        %v756 = vadd.f32 0.0, %v755
        %v757 = vpop.f32.mrf.mxu0
        %758 = vmatprep.mubr.f32.mxu0 0.0
        %759 = vmatmul.mubr.f32.gmra.mxu0 %v471
        %v760 = vpop.f32.mrf.mxu0
        %v761 = vadd.f32 0.0, %v760
        %v762 = vpop.f32.mrf.mxu0
        %763 = vmatprep.mubr.f32.mxu0 0.0
        %764 = vmatmul.mubr.f32.gmra.mxu0 %v474
        %v765 = vpop.f32.mrf.mxu0
        %v766 = vadd.f32 0.0, %v765
        %v767 = vpop.f32.mrf.mxu0
        %768 = vmatprep.mubr.f32.mxu0 0.0
        %769 = vmatmul.mubr.f32.gmra.mxu0 %v477
        %v770 = vpop.f32.mrf.mxu0
        %v771 = vadd.f32 0.0, %v770
        %v772 = vpop.f32.mrf.mxu0
        %773 = vmatprep.mubr.f32.mxu0 0.0
        %774 = vmatmul.mubr.f32.gmra.mxu0 %v480
        %v775 = vpop.f32.mrf.mxu0
        %v776 = vadd.f32 0.0, %v775
        %v777 = vpop.f32.mrf.mxu0
        %778 = vmatprep.mubr.f32.mxu0 0.0
        %779 = vmatmul.mubr.f32.gmra.mxu0 %v483
        %v780 = vpop.f32.mrf.mxu0
        %v781 = vadd.f32 0.0, %v780
        %v782 = vpop.f32.mrf.mxu0
        %783 = vmatprep.mubr.f32.mxu0 0.0
        %784 = vmatmul.mubr.f32.gmra.mxu0 %v486
        %v785 = vpop.f32.mrf.mxu0
        %v786 = vadd.f32 0.0, %v785
        %v787 = vpop.f32.mrf.mxu0
        %788 = vmatprep.mubr.f32.mxu0 0.0
        %789 = vmatmul.mubr.f32.gmra.mxu0 %v489
        %v790 = vpop.f32.mrf.mxu0
        %v791 = vadd.f32 0.0, %v790
        %v792 = vpop.f32.mrf.mxu0
        %793 = vmatprep.mubr.f32.mxu0 0.0
        %794 = vmatmul.mubr.f32.gmra.mxu0 %v492
        %v795 = vpop.f32.mrf.mxu0
        %v796 = vadd.f32 0.0, %v795
        %v797 = vpop.f32.mrf.mxu0
        %798 = vmatprep.mubr.f32.mxu0 0.0
        %799 = vmatmul.mubr.f32.gmra.mxu0 %v495
        %v800 = vpop.f32.mrf.mxu0
        %v801 = vadd.f32 0.0, %v800
        %v802 = vpop.f32.mrf.mxu0
        %803 = vmatprep.mubr.f32.mxu0 0.0
        %804 = vmatmul.mubr.f32.gmra.mxu0 %v498
        %v805 = vpop.f32.mrf.mxu0
        %v806 = vadd.f32 0.0, %v805
        %v807 = vpop.f32.mrf.mxu0
        %808 = vmatprep.mubr.f32.mxu0 0.0
        %809 = vmatmul.mubr.f32.gmra.mxu0 %v501
        %v810 = vpop.f32.mrf.mxu0
        %v811 = vadd.f32 0.0, %v810
        %v812 = vpop.f32.mrf.mxu0
        %813 = vmatprep.mubr.f32.mxu0 0.0
        %814 = vmatmul.mubr.f32.gmra.mxu0 %v504
        %v815 = vpop.f32.mrf.mxu0
        %v816 = vadd.f32 0.0, %v815
        %v817 = vpop.f32.mrf.mxu0
        %818 = vmatprep.mubr.f32.mxu0 0.0
        %819 = vmatmul.mubr.f32.gmra.mxu0 %v507
        %v820 = vpop.f32.mrf.mxu0
        %v821 = vadd.f32 0.0, %v820
        %v822 = vpop.f32.mrf.mxu0
        %823 = vmatprep.mubr.f32.mxu0 0.0
        %824 = vmatmul.mubr.f32.gmra.mxu0 %v510
        %v825 = vpop.f32.mrf.mxu0
        %v826 = vadd.f32 0.0, %v825
        %v827 = vpop.f32.mrf.mxu0
        %828 = vmatprep.mubr.f32.mxu0 0.0
        %829 = vmatmul.mubr.f32.gmra.mxu0 %v513
        %v830 = vpop.f32.mrf.mxu0
        %v831 = vadd.f32 0.0, %v830
        %v832 = vpop.f32.mrf.mxu0
        %833 = vmatprep.mubr.f32.mxu0 0.0
        %834 = vmatmul.mubr.f32.gmra.mxu0 %v516
        %v835 = vpop.f32.mrf.mxu0
        %v836 = vadd.f32 0.0, %v835
        %v837 = vpop.f32.mrf.mxu0
        %838 = vmatprep.mubr.f32.mxu0 0.0
        %839 = vmatmul.mubr.f32.gmra.mxu0 %v519
        %v840 = vpop.f32.mrf.mxu0
        %v841 = vadd.f32 0.0, %v840
        %v842 = vpop.f32.mrf.mxu0
        %843 = vmatprep.mubr.f32.mxu0 0.0
        %844 = vmatmul.mubr.f32.gmra.mxu0 %v522
        %v845 = vpop.f32.mrf.mxu0
        %v846 = vadd.f32 0.0, %v845
        %v847 = vpop.f32.mrf.mxu0
        %848 = vmatprep.mubr.f32.mxu0 0.0
        %849 = vmatmul.mubr.f32.gmra.mxu0 %v525
        %v850 = vpop.f32.mrf.mxu0
        %v851 = vadd.f32 0.0, %v850
        %v852 = vpop.f32.mrf.mxu0
        %853 = vmatprep.mubr.f32.mxu0 0.0
        %854 = vmatmul.mubr.f32.gmra.mxu0 %v528
        %v855 = vpop.f32.mrf.mxu0
        %v856 = vadd.f32 0.0, %v855
        %v857 = vpop.f32.mrf.mxu0
        %858 = vmatprep.mubr.f32.mxu0 0.0
        %859 = vmatmul.mubr.f32.gmra.mxu0 %v531
        %v860 = vpop.f32.mrf.mxu0
        %v861 = vadd.f32 0.0, %v860
        %v862 = vpop.f32.mrf.mxu0
        %863 = vmatprep.mubr.f32.mxu0 0.0
        %864 = vmatmul.mubr.f32.gmra.mxu0 %v534
        %v865 = vpop.f32.mrf.mxu0
        %v866 = vadd.f32 0.0, %v865
        %v867 = vpop.f32.mrf.mxu0
        %868 = vmatprep.mubr.f32.mxu0 0.0
        %869 = vmatmul.mubr.f32.gmra.mxu0 %v537
        %v870 = vpop.f32.mrf.mxu0
        %v871 = vadd.f32 0.0, %v870
        %v872 = vpop.f32.mrf.mxu0
        %873 = vmatprep.mubr.f32.mxu0 0.0
        %874 = vmatmul.mubr.f32.gmra.mxu0 %v540
        %v875 = vpop.f32.mrf.mxu0
        %v876 = vadd.f32 0.0, %v875
        %v877 = vpop.f32.mrf.mxu0
        %878 = vmatprep.mubr.f32.mxu0 0.0
        %879 = vmatmul.mubr.f32.gmra.mxu0 %v543
        %v880 = vpop.f32.mrf.mxu0
        %v881 = vadd.f32 0.0, %v880
        %v882 = vpop.f32.mrf.mxu0
        %883 = vdwg.mxu0
        %v885 = vsel %vm382, %v268, 0
        %v888 = vsel %vm382, %v269, 0
        %v891 = vsel %vm382, %v270, 0
        %v894 = vsel %vm382, %v271, 0
        %v897 = vsel %vm382, %v272, 0
        %v900 = vsel %vm382, %v273, 0
        %v903 = vsel %vm382, %v274, 0
        %v906 = vsel %vm382, %v275, 0
        %v909 = vsel %vm382, %v276, 0
        %v912 = vsel %vm382, %v277, 0
        %v915 = vsel %vm382, %v278, 0
        %v918 = vsel %vm382, %v279, 0
        %v921 = vsel %vm382, %v280, 0
        %v924 = vsel %vm382, %v281, 0
        %v927 = vsel %vm382, %v282, 0
        %v930 = vsel %vm382, %v283, 0
        %v933 = vsel %vm382, %v284, 0
        %v936 = vsel %vm382, %v285, 0
        %v939 = vsel %vm382, %v286, 0
        %v942 = vsel %vm382, %v287, 0
        %v945 = vsel %vm382, %v288, 0
        %v948 = vsel %vm382, %v289, 0
        %v951 = vsel %vm382, %v290, 0
        %v954 = vsel %vm382, %v291, 0
        %v957 = vsel %vm382, %v292, 0
        %v960 = vsel %vm382, %v293, 0
        %v963 = vsel %vm382, %v294, 0
        %v966 = vsel %vm382, %v295, 0
        %v969 = vsel %vm382, %v296, 0
        %v972 = vsel %vm382, %v297, 0
        %v975 = vsel %vm382, %v298, 0
        %v978 = vsel %vm382, %v299, 0
        %v981 = vsel %vm382, %v300, 0
        %v984 = vsel %vm382, %v301, 0
        %v987 = vsel %vm382, %v302, 0
        %v990 = vsel %vm382, %v303, 0
        %v993 = vsel %vm382, %v304, 0
        %v996 = vsel %vm382, %v305, 0
        %v999 = vsel %vm382, %v306, 0
        %v1002 = vsel %vm382, %v307, 0
        %v1005 = vsel %vm382, %v308, 0
        %v1008 = vsel %vm382, %v309, 0
        %v1011 = vsel %vm382, %v310, 0
        %v1014 = vsel %vm382, %v311, 0
        %v1017 = vsel %vm382, %v312, 0
        %v1020 = vsel %vm382, %v313, 0
        %v1023 = vsel %vm382, %v314, 0
        %v1026 = vsel %vm382, %v315, 0
        %v1029 = vsel %vm382, %v316, 0
        %v1032 = vsel %vm382, %v317, 0
        %v1035 = vsel %vm382, %v318, 0
        %v1038 = vsel %vm382, %v319, 0
        %v1041 = vsel %vm382, %v320, 0
        %v1044 = vsel %vm382, %v321, 0
        %v1047 = vsel %vm545, %v323, 0
        %1049 = vmatprep.subr.mxu0 0.0
        %1050 = vmatpush1.msra.mxu0 0.0
        %1051 = vmatprep.subr.mxu0 0.0
        %1052 = vmatpush1.msra.mxu0 0.0
        %1053 = vmatprep.subr.mxu0 0.0
        %1054 = vmatpush1.msra.mxu0 0.0
        %1055 = vmatprep.subr.mxu0 0.0
        %1056 = vmatpush1.msra.mxu0 0.0
        %1057 = vmatprep.subr.mxu0 0.0
        %1058 = vmatpush1.msra.mxu0 0.0
        %1059 = vmatprep.subr.mxu0 0.0
        %1060 = vmatpush1.msra.mxu0 0.0
        %1061 = vmatprep.subr.mxu0 0.0
        %1062 = vmatpush1.msra.mxu0 0.0
        %1063 = vmatprep.subr.mxu0 0.0
        %1064 = vmatpush1.msra.mxu0 0.0
        %1065 = vmatprep.subr.mxu0 0.0
        %1066 = vmatpush1.msra.mxu0 0.0
        %1067 = vmatprep.subr.mxu0 0.0
        %1068 = vmatpush1.msra.mxu0 0.0
        %1069 = vmatprep.subr.mxu0 0.0
        %1070 = vmatpush1.msra.mxu0 0.0
        %1071 = vmatprep.subr.mxu0 0.0
        %1072 = vmatpush1.msra.mxu0 0.0
        %1073 = vmatprep.subr.mxu0 0.0
        %1074 = vmatpush1.msra.mxu0 0.0
        %1075 = vmatprep.subr.mxu0 0.0
        %1076 = vmatpush1.msra.mxu0 0.0
        %1077 = vmatprep.subr.mxu0 0.0
        %1078 = vmatpush1.msra.mxu0 %v1047
        %1079 = vmatprep.subr.mxu0 0.0
        %1080 = vmatpush1.msra.mxu0 %v322
        %1081 = vmatprep.subr.mxu0 0.0
        %1082 = vmatpush2.msra.mxu0 0.0
        %1083 = vmatprep.subr.mxu0 0.0
        %1084 = vmatpush2.msra.mxu0 0.0
        %1085 = vmatprep.subr.mxu0 0.0
        %1086 = vmatpush2.msra.mxu0 0.0
        %1087 = vmatprep.subr.mxu0 0.0
        %1088 = vmatpush2.msra.mxu0 0.0
        %1089 = vmatprep.subr.mxu0 0.0
        %1090 = vmatpush2.msra.mxu0 0.0
        %1091 = vmatprep.subr.mxu0 0.0
        %1092 = vmatpush2.msra.mxu0 0.0
        %1093 = vmatprep.subr.mxu0 0.0
        %1094 = vmatpush2.msra.mxu0 0.0
        %1095 = vmatprep.subr.mxu0 0.0
        %1096 = vmatpush2.msra.mxu0 0.0
        %1097 = vmatprep.subr.mxu0 0.0
        %1098 = vmatpush2.msra.mxu0 0.0
        %1099 = vmatprep.subr.mxu0 0.0
        %1100 = vmatpush2.msra.mxu0 0.0
        %1101 = vmatprep.subr.mxu0 0.0
        %1102 = vmatpush2.msra.mxu0 0.0
        %1103 = vmatprep.subr.mxu0 0.0
        %1104 = vmatpush2.msra.mxu0 0.0
        %1105 = vmatprep.subr.mxu0 0.0
        %1106 = vmatpush2.msra.mxu0 0.0
        %1107 = vmatprep.subr.mxu0 0.0
        %1108 = vmatpush2.msra.mxu0 0.0
        %1109 = vmatprep.subr.mxu0 0.0
        %1110 = vmatpush2.msra.mxu0 0.0
        %1111 = vmatprep.subr.mxu0 0.0
        %1112 = vmatpush2.msra.mxu0 0.0
        %1113 = vmatprep.mubr.f32.mxu0 0.0
        %1114 = vmatmul.mubr.f32.gmra.mxu0 %v885
        %v1115 = vpop.f32.mrf.mxu0
        %v1116 = vadd.f32 %v616, %v1115
        %v1117 = vpop.f32.mrf.mxu0
        %1118 = vmatprep.mubr.f32.mxu0 0.0
        %1119 = vmatmul.mubr.f32.gmra.mxu0 %v888
        %v1120 = vpop.f32.mrf.mxu0
        %v1121 = vadd.f32 %v621, %v1120
        %v1122 = vpop.f32.mrf.mxu0
        %1123 = vmatprep.mubr.f32.mxu0 0.0
        %1124 = vmatmul.mubr.f32.gmra.mxu0 %v891
        %v1125 = vpop.f32.mrf.mxu0
        %v1126 = vadd.f32 %v626, %v1125
        %v1127 = vpop.f32.mrf.mxu0
        %1128 = vmatprep.mubr.f32.mxu0 0.0
        %1129 = vmatmul.mubr.f32.gmra.mxu0 %v894
        %v1130 = vpop.f32.mrf.mxu0
        %v1131 = vadd.f32 %v631, %v1130
        %v1132 = vpop.f32.mrf.mxu0
        %1133 = vmatprep.mubr.f32.mxu0 0.0
        %1134 = vmatmul.mubr.f32.gmra.mxu0 %v897
        %v1135 = vpop.f32.mrf.mxu0
        %v1136 = vadd.f32 %v636, %v1135
        %v1137 = vpop.f32.mrf.mxu0
        %1138 = vmatprep.mubr.f32.mxu0 0.0
        %1139 = vmatmul.mubr.f32.gmra.mxu0 %v900
        %v1140 = vpop.f32.mrf.mxu0
        %v1141 = vadd.f32 %v641, %v1140
        %v1142 = vpop.f32.mrf.mxu0
        %1143 = vmatprep.mubr.f32.mxu0 0.0
        %1144 = vmatmul.mubr.f32.gmra.mxu0 %v903
        %v1145 = vpop.f32.mrf.mxu0
        %v1146 = vadd.f32 %v646, %v1145
        %v1147 = vpop.f32.mrf.mxu0
        %1148 = vmatprep.mubr.f32.mxu0 0.0
        %1149 = vmatmul.mubr.f32.gmra.mxu0 %v906
        %v1150 = vpop.f32.mrf.mxu0
        %v1151 = vadd.f32 %v651, %v1150
        %v1152 = vpop.f32.mrf.mxu0
        %1153 = vmatprep.mubr.f32.mxu0 0.0
        %1154 = vmatmul.mubr.f32.gmra.mxu0 %v909
        %v1155 = vpop.f32.mrf.mxu0
        %v1156 = vadd.f32 %v656, %v1155
        %v1157 = vpop.f32.mrf.mxu0
        %1158 = vmatprep.mubr.f32.mxu0 0.0
        %1159 = vmatmul.mubr.f32.gmra.mxu0 %v912
        %v1160 = vpop.f32.mrf.mxu0
        %v1161 = vadd.f32 %v661, %v1160
        %v1162 = vpop.f32.mrf.mxu0
        %1163 = vmatprep.mubr.f32.mxu0 0.0
        %1164 = vmatmul.mubr.f32.gmra.mxu0 %v915
        %v1165 = vpop.f32.mrf.mxu0
        %v1166 = vadd.f32 %v666, %v1165
        %v1167 = vpop.f32.mrf.mxu0
        %1168 = vmatprep.mubr.f32.mxu0 0.0
        %1169 = vmatmul.mubr.f32.gmra.mxu0 %v918
        %v1170 = vpop.f32.mrf.mxu0
        %v1171 = vadd.f32 %v671, %v1170
        %v1172 = vpop.f32.mrf.mxu0
        %1173 = vmatprep.mubr.f32.mxu0 0.0
        %1174 = vmatmul.mubr.f32.gmra.mxu0 %v921
        %v1175 = vpop.f32.mrf.mxu0
        %v1176 = vadd.f32 %v676, %v1175
        %v1177 = vpop.f32.mrf.mxu0
        %1178 = vmatprep.mubr.f32.mxu0 0.0
        %1179 = vmatmul.mubr.f32.gmra.mxu0 %v924
        %v1180 = vpop.f32.mrf.mxu0
        %v1181 = vadd.f32 %v681, %v1180
        %v1182 = vpop.f32.mrf.mxu0
        %1183 = vmatprep.mubr.f32.mxu0 0.0
        %1184 = vmatmul.mubr.f32.gmra.mxu0 %v927
        %v1185 = vpop.f32.mrf.mxu0
        %v1186 = vadd.f32 %v686, %v1185
        %v1187 = vpop.f32.mrf.mxu0
        %1188 = vmatprep.mubr.f32.mxu0 0.0
        %1189 = vmatmul.mubr.f32.gmra.mxu0 %v930
        %v1190 = vpop.f32.mrf.mxu0
        %v1191 = vadd.f32 %v691, %v1190
        %v1192 = vpop.f32.mrf.mxu0
        %1193 = vmatprep.mubr.f32.mxu0 0.0
        %1194 = vmatmul.mubr.f32.gmra.mxu0 %v933
        %v1195 = vpop.f32.mrf.mxu0
        %v1196 = vadd.f32 %v696, %v1195
        %v1197 = vpop.f32.mrf.mxu0
        %1198 = vmatprep.mubr.f32.mxu0 0.0
        %1199 = vmatmul.mubr.f32.gmra.mxu0 %v936
        %v1200 = vpop.f32.mrf.mxu0
        %v1201 = vadd.f32 %v701, %v1200
        %v1202 = vpop.f32.mrf.mxu0
        %1203 = vmatprep.mubr.f32.mxu0 0.0
        %1204 = vmatmul.mubr.f32.gmra.mxu0 %v939
        %v1205 = vpop.f32.mrf.mxu0
        %v1206 = vadd.f32 %v706, %v1205
        %v1207 = vpop.f32.mrf.mxu0
        %1208 = vmatprep.mubr.f32.mxu0 0.0
        %1209 = vmatmul.mubr.f32.gmra.mxu0 %v942
        %v1210 = vpop.f32.mrf.mxu0
        %v1211 = vadd.f32 %v711, %v1210
        %v1212 = vpop.f32.mrf.mxu0
        %1213 = vmatprep.mubr.f32.mxu0 0.0
        %1214 = vmatmul.mubr.f32.gmra.mxu0 %v945
        %v1215 = vpop.f32.mrf.mxu0
        %v1216 = vadd.f32 %v716, %v1215
        %v1217 = vpop.f32.mrf.mxu0
        %1218 = vmatprep.mubr.f32.mxu0 0.0
        %1219 = vmatmul.mubr.f32.gmra.mxu0 %v948
        %v1220 = vpop.f32.mrf.mxu0
        %v1221 = vadd.f32 %v721, %v1220
        %v1222 = vpop.f32.mrf.mxu0
        %1223 = vmatprep.mubr.f32.mxu0 0.0
        %1224 = vmatmul.mubr.f32.gmra.mxu0 %v951
        %v1225 = vpop.f32.mrf.mxu0
        %v1226 = vadd.f32 %v726, %v1225
        %v1227 = vpop.f32.mrf.mxu0
        %1228 = vmatprep.mubr.f32.mxu0 0.0
        %1229 = vmatmul.mubr.f32.gmra.mxu0 %v954
        %v1230 = vpop.f32.mrf.mxu0
        %v1231 = vadd.f32 %v731, %v1230
        %v1232 = vpop.f32.mrf.mxu0
        %1233 = vmatprep.mubr.f32.mxu0 0.0
        %1234 = vmatmul.mubr.f32.gmra.mxu0 %v957
        %v1235 = vpop.f32.mrf.mxu0
        %v1236 = vadd.f32 %v736, %v1235
        %v1237 = vpop.f32.mrf.mxu0
        %1238 = vmatprep.mubr.f32.mxu0 0.0
        %1239 = vmatmul.mubr.f32.gmra.mxu0 %v960
        %v1240 = vpop.f32.mrf.mxu0
        %v1241 = vadd.f32 %v741, %v1240
        %v1242 = vpop.f32.mrf.mxu0
        %1243 = vmatprep.mubr.f32.mxu0 0.0
        %1244 = vmatmul.mubr.f32.gmra.mxu0 %v963
        %v1245 = vpop.f32.mrf.mxu0
        %v1246 = vadd.f32 %v746, %v1245
        %v1247 = vpop.f32.mrf.mxu0
        %1248 = vmatprep.mubr.f32.mxu0 0.0
        %1249 = vmatmul.mubr.f32.gmra.mxu0 %v966
        %v1250 = vpop.f32.mrf.mxu0
        %v1251 = vadd.f32 %v751, %v1250
        %v1252 = vpop.f32.mrf.mxu0
        %1253 = vmatprep.mubr.f32.mxu0 0.0
        %1254 = vmatmul.mubr.f32.gmra.mxu0 %v969
        %v1255 = vpop.f32.mrf.mxu0
        %v1256 = vadd.f32 %v756, %v1255
        %v1257 = vpop.f32.mrf.mxu0
        %1258 = vmatprep.mubr.f32.mxu0 0.0
        %1259 = vmatmul.mubr.f32.gmra.mxu0 %v972
        %v1260 = vpop.f32.mrf.mxu0
        %v1261 = vadd.f32 %v761, %v1260
        %v1262 = vpop.f32.mrf.mxu0
        %1263 = vmatprep.mubr.f32.mxu0 0.0
        %1264 = vmatmul.mubr.f32.gmra.mxu0 %v975
        %v1265 = vpop.f32.mrf.mxu0
        %v1266 = vadd.f32 %v766, %v1265
        %v1267 = vpop.f32.mrf.mxu0
        %1268 = vmatprep.mubr.f32.mxu0 0.0
        %1269 = vmatmul.mubr.f32.gmra.mxu0 %v978
        %v1270 = vpop.f32.mrf.mxu0
        %v1271 = vadd.f32 %v771, %v1270
        %v1272 = vpop.f32.mrf.mxu0
        %1273 = vmatprep.mubr.f32.mxu0 0.0
        %1274 = vmatmul.mubr.f32.gmra.mxu0 %v981
        %v1275 = vpop.f32.mrf.mxu0
        %v1276 = vadd.f32 %v776, %v1275
        %v1277 = vpop.f32.mrf.mxu0
        %1278 = vmatprep.mubr.f32.mxu0 0.0
        %1279 = vmatmul.mubr.f32.gmra.mxu0 %v984
        %v1280 = vpop.f32.mrf.mxu0
        %v1281 = vadd.f32 %v781, %v1280
        %v1282 = vpop.f32.mrf.mxu0
        %1283 = vmatprep.mubr.f32.mxu0 0.0
        %1284 = vmatmul.mubr.f32.gmra.mxu0 %v987
        %v1285 = vpop.f32.mrf.mxu0
        %v1286 = vadd.f32 %v786, %v1285
        %v1287 = vpop.f32.mrf.mxu0
        %1288 = vmatprep.mubr.f32.mxu0 0.0
        %1289 = vmatmul.mubr.f32.gmra.mxu0 %v990
        %v1290 = vpop.f32.mrf.mxu0
        %v1291 = vadd.f32 %v791, %v1290
        %v1292 = vpop.f32.mrf.mxu0
        %1293 = vmatprep.mubr.f32.mxu0 0.0
        %1294 = vmatmul.mubr.f32.gmra.mxu0 %v993
        %v1295 = vpop.f32.mrf.mxu0
        %v1296 = vadd.f32 %v796, %v1295
        %v1297 = vpop.f32.mrf.mxu0
        %1298 = vmatprep.mubr.f32.mxu0 0.0
        %1299 = vmatmul.mubr.f32.gmra.mxu0 %v996
        %v1300 = vpop.f32.mrf.mxu0
        %v1301 = vadd.f32 %v801, %v1300
        %v1302 = vpop.f32.mrf.mxu0
        %1303 = vmatprep.mubr.f32.mxu0 0.0
        %1304 = vmatmul.mubr.f32.gmra.mxu0 %v999
        %v1305 = vpop.f32.mrf.mxu0
        %v1306 = vadd.f32 %v806, %v1305
        %v1307 = vpop.f32.mrf.mxu0
        %1308 = vmatprep.mubr.f32.mxu0 0.0
        %1309 = vmatmul.mubr.f32.gmra.mxu0 %v1002
        %v1310 = vpop.f32.mrf.mxu0
        %v1311 = vadd.f32 %v811, %v1310
        %v1312 = vpop.f32.mrf.mxu0
        %1313 = vmatprep.mubr.f32.mxu0 0.0
        %1314 = vmatmul.mubr.f32.gmra.mxu0 %v1005
        %v1315 = vpop.f32.mrf.mxu0
        %v1316 = vadd.f32 %v816, %v1315
        %v1317 = vpop.f32.mrf.mxu0
        %1318 = vmatprep.mubr.f32.mxu0 0.0
        %1319 = vmatmul.mubr.f32.gmra.mxu0 %v1008
        %v1320 = vpop.f32.mrf.mxu0
        %v1321 = vadd.f32 %v821, %v1320
        %v1322 = vpop.f32.mrf.mxu0
        %1323 = vmatprep.mubr.f32.mxu0 0.0
        %1324 = vmatmul.mubr.f32.gmra.mxu0 %v1011
        %v1325 = vpop.f32.mrf.mxu0
        %v1326 = vadd.f32 %v826, %v1325
        %v1327 = vpop.f32.mrf.mxu0
        %1328 = vmatprep.mubr.f32.mxu0 0.0
        %1329 = vmatmul.mubr.f32.gmra.mxu0 %v1014
        %v1330 = vpop.f32.mrf.mxu0
        %v1331 = vadd.f32 %v831, %v1330
        %v1332 = vpop.f32.mrf.mxu0
        %1333 = vmatprep.mubr.f32.mxu0 0.0
        %1334 = vmatmul.mubr.f32.gmra.mxu0 %v1017
        %v1335 = vpop.f32.mrf.mxu0
        %v1336 = vadd.f32 %v836, %v1335
        %v1337 = vpop.f32.mrf.mxu0
        %1338 = vmatprep.mubr.f32.mxu0 0.0
        %1339 = vmatmul.mubr.f32.gmra.mxu0 %v1020
        %v1340 = vpop.f32.mrf.mxu0
        %v1341 = vadd.f32 %v841, %v1340
        %v1342 = vpop.f32.mrf.mxu0
        %1343 = vmatprep.mubr.f32.mxu0 0.0
        %1344 = vmatmul.mubr.f32.gmra.mxu0 %v1023
        %v1345 = vpop.f32.mrf.mxu0
        %v1346 = vadd.f32 %v846, %v1345
        %v1347 = vpop.f32.mrf.mxu0
        %1348 = vmatprep.mubr.f32.mxu0 0.0
        %1349 = vmatmul.mubr.f32.gmra.mxu0 %v1026
        %v1350 = vpop.f32.mrf.mxu0
        %v1351 = vadd.f32 %v851, %v1350
        %v1352 = vpop.f32.mrf.mxu0
        %1353 = vmatprep.mubr.f32.mxu0 0.0
        %1354 = vmatmul.mubr.f32.gmra.mxu0 %v1029
        %v1355 = vpop.f32.mrf.mxu0
        %v1356 = vadd.f32 %v856, %v1355
        %v1357 = vpop.f32.mrf.mxu0
        %1358 = vmatprep.mubr.f32.mxu0 0.0
        %1359 = vmatmul.mubr.f32.gmra.mxu0 %v1032
        %v1360 = vpop.f32.mrf.mxu0
        %v1361 = vadd.f32 %v861, %v1360
        %v1362 = vpop.f32.mrf.mxu0
        %1363 = vmatprep.mubr.f32.mxu0 0.0
        %1364 = vmatmul.mubr.f32.gmra.mxu0 %v1035
        %v1365 = vpop.f32.mrf.mxu0
        %v1366 = vadd.f32 %v866, %v1365
        %v1367 = vpop.f32.mrf.mxu0
        %1368 = vmatprep.mubr.f32.mxu0 0.0
        %1369 = vmatmul.mubr.f32.gmra.mxu0 %v1038
        %v1370 = vpop.f32.mrf.mxu0
        %v1371 = vadd.f32 %v871, %v1370
        %v1372 = vpop.f32.mrf.mxu0
        %1373 = vmatprep.mubr.f32.mxu0 0.0
        %1374 = vmatmul.mubr.f32.gmra.mxu0 %v1041
        %v1375 = vpop.f32.mrf.mxu0
        %v1376 = vadd.f32 %v876, %v1375
        %v1377 = vpop.f32.mrf.mxu0
        %1378 = vmatprep.mubr.f32.mxu0 0.0
        %1379 = vmatmul.mubr.f32.gmra.mxu0 %v1044
        %v1380 = vpop.f32.mrf.mxu0
        %v1381 = vadd.f32 %v881, %v1380
        %v1382 = vpop.f32.mrf.mxu0
        %1383 = vdwg.mxu0
        %v1384 = vld [vmem:[%s257] sm:$0xff]
        %v1385 = vld [vmem:[%s257 + $0x8] sm:$0xff]
        %v1386 = vld [vmem:[%s257 + $0x10] sm:$0xff]
        %v1387 = vld [vmem:[%s257 + $0x18] sm:$0xff]
        %v1388 = vld [vmem:[%s257 + $0x20] sm:$0xff]
        %v1389 = vld [vmem:[%s257 + $0x28] sm:$0xff]
        %v1390 = vld [vmem:[%s257 + $0x30] sm:$0xff]
        %v1391 = vld [vmem:[%s257 + $0x38] sm:$0xff]
        %v1392 = vld [vmem:[%s257 + $0x40] sm:$0xff]
        %v1393 = vld [vmem:[%s257 + $0x48] sm:$0xff]
        %v1394 = vld [vmem:[%s257 + $0x50] sm:$0xff]
        %v1395 = vld [vmem:[%s257 + $0x58] sm:$0xff]
        %v1396 = vld [vmem:[%s257 + $0x60] sm:$0xff]
        %v1397 = vld [vmem:[%s257 + $0x68] sm:$0xff]
        %v1398 = vld [vmem:[%s257 + $0x70] sm:$0xff]
        %v1399 = vld [vmem:[%s257 + $0x78] sm:$0xff]
        %v1400 = vld [vmem:[%s257 + $0x80] sm:$0xff]
        %v1401 = vld [vmem:[%s257 + $0x88] sm:$0xff]
        %v1402 = vld [vmem:[%s257 + $0x90] sm:$0xff]
        %v1403 = vld [vmem:[%s257 + $0x98] sm:$0xff]
        %v1404 = vld [vmem:[%s257 + $0xa0] sm:$0xff]
        %v1405 = vld [vmem:[%s257 + $0xa8] sm:$0xff]
        %v1406 = vld [vmem:[%s257 + $0xb0] sm:$0xff]
        %v1407 = vld [vmem:[%s257 + $0xb8] sm:$0xff]
        %v1408 = vld [vmem:[%s257 + $0xc0] sm:$0xff]
        %v1409 = vld [vmem:[%s257 + $0xc8] sm:$0xff]
        %v1410 = vld [vmem:[%s257 + $0xd0] sm:$0xff]
        %v1411 = vld [vmem:[%s257 + $0xd8] sm:$0xff]
        %v1412 = vld [vmem:[%s257 + $0xe0] sm:$0xff]
        %v1413 = vld [vmem:[%s257 + $0xe8] sm:$0xff]
        %v1414 = vld [vmem:[%s257 + $0xf0] sm:$0xff]
        %v1415 = vld [vmem:[%s257 + $0xf8] sm:$0xff]
        %v1416 = vld [vmem:[%s257 + $0x100] sm:$0xff]
        %v1417 = vld [vmem:[%s257 + $0x108] sm:$0xff]
        %v1418 = vld [vmem:[%s257 + $0x110] sm:$0xff]
        %v1419 = vld [vmem:[%s257 + $0x118] sm:$0xff]
        %v1420 = vld [vmem:[%s257 + $0x120] sm:$0xff]
        %v1421 = vld [vmem:[%s257 + $0x128] sm:$0xff]
        %v1422 = vld [vmem:[%s257 + $0x130] sm:$0xff]
        %v1423 = vld [vmem:[%s257 + $0x138] sm:$0xff]
        %v1424 = vld [vmem:[%s257 + $0x140] sm:$0xff]
        %v1425 = vld [vmem:[%s257 + $0x148] sm:$0xff]
        %v1426 = vld [vmem:[%s257 + $0x150] sm:$0xff]
        %v1427 = vld [vmem:[%s257 + $0x158] sm:$0xff]
        %v1428 = vld [vmem:[%s257 + $0x160] sm:$0xff]
        %v1429 = vld [vmem:[%s257 + $0x168] sm:$0xff]
        %v1430 = vld [vmem:[%s257 + $0x170] sm:$0xff]
        %v1431 = vld [vmem:[%s257 + $0x178] sm:$0xff]
        %v1432 = vld [vmem:[%s257 + $0x180] sm:$0xff]
        %v1433 = vld [vmem:[%s257 + $0x188] sm:$0xff]
        %v1434 = vld [vmem:[%s257 + $0x190] sm:$0xff]
        %v1435 = vld [vmem:[%s257 + $0x198] sm:$0xff]
        %v1436 = vld [vmem:[%s257 + $0x1a0] sm:$0xff]
        %v1437 = vld [vmem:[%s257 + $0x1a8] sm:$0xff]
        %s1438 = scalar_lea.vmem %s265, 32
        %v1439 = vld [vmem:[%s1438] sm:$0xff]
        %v1440 = vld [vmem:[%s1438 + $0x8] sm:$0xf]
        %v1442 = vsel %vm382, %v1384, 0
        %v1445 = vsel %vm382, %v1385, 0
        %v1448 = vsel %vm382, %v1386, 0
        %v1451 = vsel %vm382, %v1387, 0
        %v1454 = vsel %vm382, %v1388, 0
        %v1457 = vsel %vm382, %v1389, 0
        %v1460 = vsel %vm382, %v1390, 0
        %v1463 = vsel %vm382, %v1391, 0
        %v1466 = vsel %vm382, %v1392, 0
        %v1469 = vsel %vm382, %v1393, 0
        %v1472 = vsel %vm382, %v1394, 0
        %v1475 = vsel %vm382, %v1395, 0
        %v1478 = vsel %vm382, %v1396, 0
        %v1481 = vsel %vm382, %v1397, 0
        %v1484 = vsel %vm382, %v1398, 0
        %v1487 = vsel %vm382, %v1399, 0
        %v1490 = vsel %vm382, %v1400, 0
        %v1493 = vsel %vm382, %v1401, 0
        %v1496 = vsel %vm382, %v1402, 0
        %v1499 = vsel %vm382, %v1403, 0
        %v1502 = vsel %vm382, %v1404, 0
        %v1505 = vsel %vm382, %v1405, 0
        %v1508 = vsel %vm382, %v1406, 0
        %v1511 = vsel %vm382, %v1407, 0
        %v1514 = vsel %vm382, %v1408, 0
        %v1517 = vsel %vm382, %v1409, 0
        %v1520 = vsel %vm382, %v1410, 0
        %v1523 = vsel %vm382, %v1411, 0
        %v1526 = vsel %vm382, %v1412, 0
        %v1529 = vsel %vm382, %v1413, 0
        %v1532 = vsel %vm382, %v1414, 0
        %v1535 = vsel %vm382, %v1415, 0
        %v1538 = vsel %vm382, %v1416, 0
        %v1541 = vsel %vm382, %v1417, 0
        %v1544 = vsel %vm382, %v1418, 0
        %v1547 = vsel %vm382, %v1419, 0
        %v1550 = vsel %vm382, %v1420, 0
        %v1553 = vsel %vm382, %v1421, 0
        %v1556 = vsel %vm382, %v1422, 0
        %v1559 = vsel %vm382, %v1423, 0
        %v1562 = vsel %vm382, %v1424, 0
        %v1565 = vsel %vm382, %v1425, 0
        %v1568 = vsel %vm382, %v1426, 0
        %v1571 = vsel %vm382, %v1427, 0
        %v1574 = vsel %vm382, %v1428, 0
        %v1577 = vsel %vm382, %v1429, 0
        %v1580 = vsel %vm382, %v1430, 0
        %v1583 = vsel %vm382, %v1431, 0
        %v1586 = vsel %vm382, %v1432, 0
        %v1589 = vsel %vm382, %v1433, 0
        %v1592 = vsel %vm382, %v1434, 0
        %v1595 = vsel %vm382, %v1435, 0
        %v1598 = vsel %vm382, %v1436, 0
        %v1601 = vsel %vm382, %v1437, 0
        %v1604 = vsel %vm545, %v1440, 0
        %1606 = vmatprep.subr.mxu0 0.0
        %1607 = vmatpush1.msra.mxu0 0.0
        %1608 = vmatprep.subr.mxu0 0.0
        %1609 = vmatpush1.msra.mxu0 0.0
        %1610 = vmatprep.subr.mxu0 0.0
        %1611 = vmatpush1.msra.mxu0 0.0
        %1612 = vmatprep.subr.mxu0 0.0
        %1613 = vmatpush1.msra.mxu0 0.0
        %1614 = vmatprep.subr.mxu0 0.0
        %1615 = vmatpush1.msra.mxu0 0.0
        %1616 = vmatprep.subr.mxu0 0.0
        %1617 = vmatpush1.msra.mxu0 0.0
        %1618 = vmatprep.subr.mxu0 0.0
        %1619 = vmatpush1.msra.mxu0 0.0
        %1620 = vmatprep.subr.mxu0 0.0
        %1621 = vmatpush1.msra.mxu0 0.0
        %1622 = vmatprep.subr.mxu0 0.0
        %1623 = vmatpush1.msra.mxu0 0.0
        %1624 = vmatprep.subr.mxu0 0.0
        %1625 = vmatpush1.msra.mxu0 0.0
        %1626 = vmatprep.subr.mxu0 0.0
        %1627 = vmatpush1.msra.mxu0 0.0
        %1628 = vmatprep.subr.mxu0 0.0
        %1629 = vmatpush1.msra.mxu0 0.0
        %1630 = vmatprep.subr.mxu0 0.0
        %1631 = vmatpush1.msra.mxu0 0.0
        %1632 = vmatprep.subr.mxu0 0.0
        %1633 = vmatpush1.msra.mxu0 0.0
        %1634 = vmatprep.subr.mxu0 0.0
        %1635 = vmatpush1.msra.mxu0 %v1604
        %1636 = vmatprep.subr.mxu0 0.0
        %1637 = vmatpush1.msra.mxu0 %v1439
        %1638 = vmatprep.subr.mxu0 0.0
        %1639 = vmatpush2.msra.mxu0 0.0
        %1640 = vmatprep.subr.mxu0 0.0
        %1641 = vmatpush2.msra.mxu0 0.0
        %1642 = vmatprep.subr.mxu0 0.0
        %1643 = vmatpush2.msra.mxu0 0.0
        %1644 = vmatprep.subr.mxu0 0.0
        %1645 = vmatpush2.msra.mxu0 0.0
        %1646 = vmatprep.subr.mxu0 0.0
        %1647 = vmatpush2.msra.mxu0 0.0
        %1648 = vmatprep.subr.mxu0 0.0
        %1649 = vmatpush2.msra.mxu0 0.0
        %1650 = vmatprep.subr.mxu0 0.0
        %1651 = vmatpush2.msra.mxu0 0.0
        %1652 = vmatprep.subr.mxu0 0.0
        %1653 = vmatpush2.msra.mxu0 0.0
        %1654 = vmatprep.subr.mxu0 0.0
        %1655 = vmatpush2.msra.mxu0 0.0
        %1656 = vmatprep.subr.mxu0 0.0
        %1657 = vmatpush2.msra.mxu0 0.0
        %1658 = vmatprep.subr.mxu0 0.0
        %1659 = vmatpush2.msra.mxu0 0.0
        %1660 = vmatprep.subr.mxu0 0.0
        %1661 = vmatpush2.msra.mxu0 0.0
        %1662 = vmatprep.subr.mxu0 0.0
        %1663 = vmatpush2.msra.mxu0 0.0
        %1664 = vmatprep.subr.mxu0 0.0
        %1665 = vmatpush2.msra.mxu0 0.0
        %1666 = vmatprep.subr.mxu0 0.0
        %1667 = vmatpush2.msra.mxu0 0.0
        %1668 = vmatprep.subr.mxu0 0.0
        %1669 = vmatpush2.msra.mxu0 0.0
        %1670 = vmatprep.mubr.f32.mxu0 0.0
        %1671 = vmatmul.mubr.f32.gmra.mxu0 %v1442
        %v1672 = vpop.f32.mrf.mxu0
        %v1673 = vadd.f32 0.0, %v1672
        %v1674 = vpop.f32.mrf.mxu0
        %1675 = vmatprep.mubr.f32.mxu0 0.0
        %1676 = vmatmul.mubr.f32.gmra.mxu0 %v1445
        %v1677 = vpop.f32.mrf.mxu0
        %v1678 = vadd.f32 0.0, %v1677
        %v1679 = vpop.f32.mrf.mxu0
        %1680 = vmatprep.mubr.f32.mxu0 0.0
        %1681 = vmatmul.mubr.f32.gmra.mxu0 %v1448
        %v1682 = vpop.f32.mrf.mxu0
        %v1683 = vadd.f32 0.0, %v1682
        %v1684 = vpop.f32.mrf.mxu0
        %1685 = vmatprep.mubr.f32.mxu0 0.0
        %1686 = vmatmul.mubr.f32.gmra.mxu0 %v1451
        %v1687 = vpop.f32.mrf.mxu0
        %v1688 = vadd.f32 0.0, %v1687
        %v1689 = vpop.f32.mrf.mxu0
        %1690 = vmatprep.mubr.f32.mxu0 0.0
        %1691 = vmatmul.mubr.f32.gmra.mxu0 %v1454
        %v1692 = vpop.f32.mrf.mxu0
        %v1693 = vadd.f32 0.0, %v1692
        %v1694 = vpop.f32.mrf.mxu0
        %1695 = vmatprep.mubr.f32.mxu0 0.0
        %1696 = vmatmul.mubr.f32.gmra.mxu0 %v1457
        %v1697 = vpop.f32.mrf.mxu0
        %v1698 = vadd.f32 0.0, %v1697
        %v1699 = vpop.f32.mrf.mxu0
        %1700 = vmatprep.mubr.f32.mxu0 0.0
        %1701 = vmatmul.mubr.f32.gmra.mxu0 %v1460
        %v1702 = vpop.f32.mrf.mxu0
        %v1703 = vadd.f32 0.0, %v1702
        %v1704 = vpop.f32.mrf.mxu0
        %1705 = vmatprep.mubr.f32.mxu0 0.0
        %1706 = vmatmul.mubr.f32.gmra.mxu0 %v1463
        %v1707 = vpop.f32.mrf.mxu0
        %v1708 = vadd.f32 0.0, %v1707
        %v1709 = vpop.f32.mrf.mxu0
        %1710 = vmatprep.mubr.f32.mxu0 0.0
        %1711 = vmatmul.mubr.f32.gmra.mxu0 %v1466
        %v1712 = vpop.f32.mrf.mxu0
        %v1713 = vadd.f32 0.0, %v1712
        %v1714 = vpop.f32.mrf.mxu0
        %1715 = vmatprep.mubr.f32.mxu0 0.0
        %1716 = vmatmul.mubr.f32.gmra.mxu0 %v1469
        %v1717 = vpop.f32.mrf.mxu0
        %v1718 = vadd.f32 0.0, %v1717
        %v1719 = vpop.f32.mrf.mxu0
        %1720 = vmatprep.mubr.f32.mxu0 0.0
        %1721 = vmatmul.mubr.f32.gmra.mxu0 %v1472
        %v1722 = vpop.f32.mrf.mxu0
        %v1723 = vadd.f32 0.0, %v1722
        %v1724 = vpop.f32.mrf.mxu0
        %1725 = vmatprep.mubr.f32.mxu0 0.0
        %1726 = vmatmul.mubr.f32.gmra.mxu0 %v1475
        %v1727 = vpop.f32.mrf.mxu0
        %v1728 = vadd.f32 0.0, %v1727
        %v1729 = vpop.f32.mrf.mxu0
        %1730 = vmatprep.mubr.f32.mxu0 0.0
        %1731 = vmatmul.mubr.f32.gmra.mxu0 %v1478
        %v1732 = vpop.f32.mrf.mxu0
        %v1733 = vadd.f32 0.0, %v1732
        %v1734 = vpop.f32.mrf.mxu0
        %1735 = vmatprep.mubr.f32.mxu0 0.0
        %1736 = vmatmul.mubr.f32.gmra.mxu0 %v1481
        %v1737 = vpop.f32.mrf.mxu0
        %v1738 = vadd.f32 0.0, %v1737
        %v1739 = vpop.f32.mrf.mxu0
        %1740 = vmatprep.mubr.f32.mxu0 0.0
        %1741 = vmatmul.mubr.f32.gmra.mxu0 %v1484
        %v1742 = vpop.f32.mrf.mxu0
        %v1743 = vadd.f32 0.0, %v1742
        %v1744 = vpop.f32.mrf.mxu0
        %1745 = vmatprep.mubr.f32.mxu0 0.0
        %1746 = vmatmul.mubr.f32.gmra.mxu0 %v1487
        %v1747 = vpop.f32.mrf.mxu0
        %v1748 = vadd.f32 0.0, %v1747
        %v1749 = vpop.f32.mrf.mxu0
        %1750 = vmatprep.mubr.f32.mxu0 0.0
        %1751 = vmatmul.mubr.f32.gmra.mxu0 %v1490
        %v1752 = vpop.f32.mrf.mxu0
        %v1753 = vadd.f32 0.0, %v1752
        %v1754 = vpop.f32.mrf.mxu0
        %1755 = vmatprep.mubr.f32.mxu0 0.0
        %1756 = vmatmul.mubr.f32.gmra.mxu0 %v1493
        %v1757 = vpop.f32.mrf.mxu0
        %v1758 = vadd.f32 0.0, %v1757
        %v1759 = vpop.f32.mrf.mxu0
        %1760 = vmatprep.mubr.f32.mxu0 0.0
        %1761 = vmatmul.mubr.f32.gmra.mxu0 %v1496
        %v1762 = vpop.f32.mrf.mxu0
        %v1763 = vadd.f32 0.0, %v1762
        %v1764 = vpop.f32.mrf.mxu0
        %1765 = vmatprep.mubr.f32.mxu0 0.0
        %1766 = vmatmul.mubr.f32.gmra.mxu0 %v1499
        %v1767 = vpop.f32.mrf.mxu0
        %v1768 = vadd.f32 0.0, %v1767
        %v1769 = vpop.f32.mrf.mxu0
        %1770 = vmatprep.mubr.f32.mxu0 0.0
        %1771 = vmatmul.mubr.f32.gmra.mxu0 %v1502
        %v1772 = vpop.f32.mrf.mxu0
        %v1773 = vadd.f32 0.0, %v1772
        %v1774 = vpop.f32.mrf.mxu0
        %1775 = vmatprep.mubr.f32.mxu0 0.0
        %1776 = vmatmul.mubr.f32.gmra.mxu0 %v1505
        %v1777 = vpop.f32.mrf.mxu0
        %v1778 = vadd.f32 0.0, %v1777
        %v1779 = vpop.f32.mrf.mxu0
        %1780 = vmatprep.mubr.f32.mxu0 0.0
        %1781 = vmatmul.mubr.f32.gmra.mxu0 %v1508
        %v1782 = vpop.f32.mrf.mxu0
        %v1783 = vadd.f32 0.0, %v1782
        %v1784 = vpop.f32.mrf.mxu0
        %1785 = vmatprep.mubr.f32.mxu0 0.0
        %1786 = vmatmul.mubr.f32.gmra.mxu0 %v1511
        %v1787 = vpop.f32.mrf.mxu0
        %v1788 = vadd.f32 0.0, %v1787
        %v1789 = vpop.f32.mrf.mxu0
        %1790 = vmatprep.mubr.f32.mxu0 0.0
        %1791 = vmatmul.mubr.f32.gmra.mxu0 %v1514
        %v1792 = vpop.f32.mrf.mxu0
        %v1793 = vadd.f32 0.0, %v1792
        %v1794 = vpop.f32.mrf.mxu0
        %1795 = vmatprep.mubr.f32.mxu0 0.0
        %1796 = vmatmul.mubr.f32.gmra.mxu0 %v1517
        %v1797 = vpop.f32.mrf.mxu0
        %v1798 = vadd.f32 0.0, %v1797
        %v1799 = vpop.f32.mrf.mxu0
        %1800 = vmatprep.mubr.f32.mxu0 0.0
        %1801 = vmatmul.mubr.f32.gmra.mxu0 %v1520
        %v1802 = vpop.f32.mrf.mxu0
        %v1803 = vadd.f32 0.0, %v1802
        %v1804 = vpop.f32.mrf.mxu0
        %1805 = vmatprep.mubr.f32.mxu0 0.0
        %1806 = vmatmul.mubr.f32.gmra.mxu0 %v1523
        %v1807 = vpop.f32.mrf.mxu0
        %v1808 = vadd.f32 0.0, %v1807
        %v1809 = vpop.f32.mrf.mxu0
        %1810 = vmatprep.mubr.f32.mxu0 0.0
        %1811 = vmatmul.mubr.f32.gmra.mxu0 %v1526
        %v1812 = vpop.f32.mrf.mxu0
        %v1813 = vadd.f32 0.0, %v1812
        %v1814 = vpop.f32.mrf.mxu0
        %1815 = vmatprep.mubr.f32.mxu0 0.0
        %1816 = vmatmul.mubr.f32.gmra.mxu0 %v1529
        %v1817 = vpop.f32.mrf.mxu0
        %v1818 = vadd.f32 0.0, %v1817
        %v1819 = vpop.f32.mrf.mxu0
        %1820 = vmatprep.mubr.f32.mxu0 0.0
        %1821 = vmatmul.mubr.f32.gmra.mxu0 %v1532
        %v1822 = vpop.f32.mrf.mxu0
        %v1823 = vadd.f32 0.0, %v1822
        %v1824 = vpop.f32.mrf.mxu0
        %1825 = vmatprep.mubr.f32.mxu0 0.0
        %1826 = vmatmul.mubr.f32.gmra.mxu0 %v1535
        %v1827 = vpop.f32.mrf.mxu0
        %v1828 = vadd.f32 0.0, %v1827
        %v1829 = vpop.f32.mrf.mxu0
        %1830 = vmatprep.mubr.f32.mxu0 0.0
        %1831 = vmatmul.mubr.f32.gmra.mxu0 %v1538
        %v1832 = vpop.f32.mrf.mxu0
        %v1833 = vadd.f32 0.0, %v1832
        %v1834 = vpop.f32.mrf.mxu0
        %1835 = vmatprep.mubr.f32.mxu0 0.0
        %1836 = vmatmul.mubr.f32.gmra.mxu0 %v1541
        %v1837 = vpop.f32.mrf.mxu0
        %v1838 = vadd.f32 0.0, %v1837
        %v1839 = vpop.f32.mrf.mxu0
        %1840 = vmatprep.mubr.f32.mxu0 0.0
        %1841 = vmatmul.mubr.f32.gmra.mxu0 %v1544
        %v1842 = vpop.f32.mrf.mxu0
        %v1843 = vadd.f32 0.0, %v1842
        %v1844 = vpop.f32.mrf.mxu0
        %1845 = vmatprep.mubr.f32.mxu0 0.0
        %1846 = vmatmul.mubr.f32.gmra.mxu0 %v1547
        %v1847 = vpop.f32.mrf.mxu0
        %v1848 = vadd.f32 0.0, %v1847
        %v1849 = vpop.f32.mrf.mxu0
        %1850 = vmatprep.mubr.f32.mxu0 0.0
        %1851 = vmatmul.mubr.f32.gmra.mxu0 %v1550
        %v1852 = vpop.f32.mrf.mxu0
        %v1853 = vadd.f32 0.0, %v1852
        %v1854 = vpop.f32.mrf.mxu0
        %1855 = vmatprep.mubr.f32.mxu0 0.0
        %1856 = vmatmul.mubr.f32.gmra.mxu0 %v1553
        %v1857 = vpop.f32.mrf.mxu0
        %v1858 = vadd.f32 0.0, %v1857
        %v1859 = vpop.f32.mrf.mxu0
        %1860 = vmatprep.mubr.f32.mxu0 0.0
        %1861 = vmatmul.mubr.f32.gmra.mxu0 %v1556
        %v1862 = vpop.f32.mrf.mxu0
        %v1863 = vadd.f32 0.0, %v1862
        %v1864 = vpop.f32.mrf.mxu0
        %1865 = vmatprep.mubr.f32.mxu0 0.0
        %1866 = vmatmul.mubr.f32.gmra.mxu0 %v1559
        %v1867 = vpop.f32.mrf.mxu0
        %v1868 = vadd.f32 0.0, %v1867
        %v1869 = vpop.f32.mrf.mxu0
        %1870 = vmatprep.mubr.f32.mxu0 0.0
        %1871 = vmatmul.mubr.f32.gmra.mxu0 %v1562
        %v1872 = vpop.f32.mrf.mxu0
        %v1873 = vadd.f32 0.0, %v1872
        %v1874 = vpop.f32.mrf.mxu0
        %1875 = vmatprep.mubr.f32.mxu0 0.0
        %1876 = vmatmul.mubr.f32.gmra.mxu0 %v1565
        %v1877 = vpop.f32.mrf.mxu0
        %v1878 = vadd.f32 0.0, %v1877
        %v1879 = vpop.f32.mrf.mxu0
        %1880 = vmatprep.mubr.f32.mxu0 0.0
        %1881 = vmatmul.mubr.f32.gmra.mxu0 %v1568
        %v1882 = vpop.f32.mrf.mxu0
        %v1883 = vadd.f32 0.0, %v1882
        %v1884 = vpop.f32.mrf.mxu0
        %1885 = vmatprep.mubr.f32.mxu0 0.0
        %1886 = vmatmul.mubr.f32.gmra.mxu0 %v1571
        %v1887 = vpop.f32.mrf.mxu0
        %v1888 = vadd.f32 0.0, %v1887
        %v1889 = vpop.f32.mrf.mxu0
        %1890 = vmatprep.mubr.f32.mxu0 0.0
        %1891 = vmatmul.mubr.f32.gmra.mxu0 %v1574
        %v1892 = vpop.f32.mrf.mxu0
        %v1893 = vadd.f32 0.0, %v1892
        %v1894 = vpop.f32.mrf.mxu0
        %1895 = vmatprep.mubr.f32.mxu0 0.0
        %1896 = vmatmul.mubr.f32.gmra.mxu0 %v1577
        %v1897 = vpop.f32.mrf.mxu0
        %v1898 = vadd.f32 0.0, %v1897
        %v1899 = vpop.f32.mrf.mxu0
        %1900 = vmatprep.mubr.f32.mxu0 0.0
        %1901 = vmatmul.mubr.f32.gmra.mxu0 %v1580
        %v1902 = vpop.f32.mrf.mxu0
        %v1903 = vadd.f32 0.0, %v1902
        %v1904 = vpop.f32.mrf.mxu0
        %1905 = vmatprep.mubr.f32.mxu0 0.0
        %1906 = vmatmul.mubr.f32.gmra.mxu0 %v1583
        %v1907 = vpop.f32.mrf.mxu0
        %v1908 = vadd.f32 0.0, %v1907
        %v1909 = vpop.f32.mrf.mxu0
        %1910 = vmatprep.mubr.f32.mxu0 0.0
        %1911 = vmatmul.mubr.f32.gmra.mxu0 %v1586
        %v1912 = vpop.f32.mrf.mxu0
        %v1913 = vadd.f32 0.0, %v1912
        %v1914 = vpop.f32.mrf.mxu0
        %1915 = vmatprep.mubr.f32.mxu0 0.0
        %1916 = vmatmul.mubr.f32.gmra.mxu0 %v1589
        %v1917 = vpop.f32.mrf.mxu0
        %v1918 = vadd.f32 0.0, %v1917
        %v1919 = vpop.f32.mrf.mxu0
        %1920 = vmatprep.mubr.f32.mxu0 0.0
        %1921 = vmatmul.mubr.f32.gmra.mxu0 %v1592
        %v1922 = vpop.f32.mrf.mxu0
        %v1923 = vadd.f32 0.0, %v1922
        %v1924 = vpop.f32.mrf.mxu0
        %1925 = vmatprep.mubr.f32.mxu0 0.0
        %1926 = vmatmul.mubr.f32.gmra.mxu0 %v1595
        %v1927 = vpop.f32.mrf.mxu0
        %v1928 = vadd.f32 0.0, %v1927
        %v1929 = vpop.f32.mrf.mxu0
        %1930 = vmatprep.mubr.f32.mxu0 0.0
        %1931 = vmatmul.mubr.f32.gmra.mxu0 %v1598
        %v1932 = vpop.f32.mrf.mxu0
        %v1933 = vadd.f32 0.0, %v1932
        %v1934 = vpop.f32.mrf.mxu0
        %1935 = vmatprep.mubr.f32.mxu0 0.0
        %1936 = vmatmul.mubr.f32.gmra.mxu0 %v1601
        %v1937 = vpop.f32.mrf.mxu0
        %v1938 = vadd.f32 0.0, %v1937
        %v1939 = vpop.f32.mrf.mxu0
        %1940 = vdwg.mxu0
        %v1941 = vadd.f32 %v1116, %v1673
        %v1942 = vadd.f32 %v1121, %v1678
        %v1943 = vadd.f32 %v1126, %v1683
        %v1944 = vadd.f32 %v1131, %v1688
        %v1945 = vadd.f32 %v1136, %v1693
        %v1946 = vadd.f32 %v1141, %v1698
        %v1947 = vadd.f32 %v1146, %v1703
        %v1948 = vadd.f32 %v1151, %v1708
        %v1949 = vadd.f32 %v1156, %v1713
        %v1950 = vadd.f32 %v1161, %v1718
        %v1951 = vadd.f32 %v1166, %v1723
        %v1952 = vadd.f32 %v1171, %v1728
        %v1953 = vadd.f32 %v1176, %v1733
        %v1954 = vadd.f32 %v1181, %v1738
        %v1955 = vadd.f32 %v1186, %v1743
        %v1956 = vadd.f32 %v1191, %v1748
        %v1957 = vadd.f32 %v1196, %v1753
        %v1958 = vadd.f32 %v1201, %v1758
        %v1959 = vadd.f32 %v1206, %v1763
        %v1960 = vadd.f32 %v1211, %v1768
        %v1961 = vadd.f32 %v1216, %v1773
        %v1962 = vadd.f32 %v1221, %v1778
        %v1963 = vadd.f32 %v1226, %v1783
        %v1964 = vadd.f32 %v1231, %v1788
        %v1965 = vadd.f32 %v1236, %v1793
        %v1966 = vadd.f32 %v1241, %v1798
        %v1967 = vadd.f32 %v1246, %v1803
        %v1968 = vadd.f32 %v1251, %v1808
        %v1969 = vadd.f32 %v1256, %v1813
        %v1970 = vadd.f32 %v1261, %v1818
        %v1971 = vadd.f32 %v1266, %v1823
        %v1972 = vadd.f32 %v1271, %v1828
        %v1973 = vadd.f32 %v1276, %v1833
        %v1974 = vadd.f32 %v1281, %v1838
        %v1975 = vadd.f32 %v1286, %v1843
        %v1976 = vadd.f32 %v1291, %v1848
        %v1977 = vadd.f32 %v1296, %v1853
        %v1978 = vadd.f32 %v1301, %v1858
        %v1979 = vadd.f32 %v1306, %v1863
        %v1980 = vadd.f32 %v1311, %v1868
        %v1981 = vadd.f32 %v1316, %v1873
        %v1982 = vadd.f32 %v1321, %v1878
        %v1983 = vadd.f32 %v1326, %v1883
        %v1984 = vadd.f32 %v1331, %v1888
        %v1985 = vadd.f32 %v1336, %v1893
        %v1986 = vadd.f32 %v1341, %v1898
        %v1987 = vadd.f32 %v1346, %v1903
        %v1988 = vadd.f32 %v1351, %v1908
        %v1989 = vadd.f32 %v1356, %v1913
        %v1990 = vadd.f32 %v1361, %v1918
        %v1991 = vadd.f32 %v1366, %v1923
        %v1992 = vadd.f32 %v1371, %v1928
        %v1993 = vadd.f32 %v1376, %v1933
        %v1994 = vadd.f32 %v1381, %v1938
        %v1995 = vld [vmem:[#allocation2] sm:$0x1]
        %v1997 = vlaneseq
        %v1998 = vshrl.u32 %v1997, 7
        %v1999 = vsub.s32 0, %v1998
        %v2000 = vrot.slane %v1995, %v1999
        %v2002 = vadd.f32 %v1941, %v2000
        %v2003 = vadd.f32 %v1942, %v2000
        %v2004 = vadd.f32 %v1943, %v2000
        %v2005 = vadd.f32 %v1944, %v2000
        %v2006 = vadd.f32 %v1945, %v2000
        %v2007 = vadd.f32 %v1946, %v2000
        %v2008 = vadd.f32 %v1947, %v2000
        %v2009 = vadd.f32 %v1948, %v2000
        %v2010 = vadd.f32 %v1949, %v2000
        %v2011 = vadd.f32 %v1950, %v2000
        %v2012 = vadd.f32 %v1951, %v2000
        %v2013 = vadd.f32 %v1952, %v2000
        %v2014 = vadd.f32 %v1953, %v2000
        %v2015 = vadd.f32 %v1954, %v2000
        %v2016 = vadd.f32 %v1955, %v2000
        %v2017 = vadd.f32 %v1956, %v2000
        %v2018 = vadd.f32 %v1957, %v2000
        %v2019 = vadd.f32 %v1958, %v2000
        %v2020 = vadd.f32 %v1959, %v2000
        %v2021 = vadd.f32 %v1960, %v2000
        %v2022 = vadd.f32 %v1961, %v2000
        %v2023 = vadd.f32 %v1962, %v2000
        %v2024 = vadd.f32 %v1963, %v2000
        %v2025 = vadd.f32 %v1964, %v2000
        %v2026 = vadd.f32 %v1965, %v2000
        %v2027 = vadd.f32 %v1966, %v2000
        %v2028 = vadd.f32 %v1967, %v2000
        %v2029 = vadd.f32 %v1968, %v2000
        %v2030 = vadd.f32 %v1969, %v2000
        %v2031 = vadd.f32 %v1970, %v2000
        %v2032 = vadd.f32 %v1971, %v2000
        %v2033 = vadd.f32 %v1972, %v2000
        %v2034 = vadd.f32 %v1973, %v2000
        %v2035 = vadd.f32 %v1974, %v2000
        %v2036 = vadd.f32 %v1975, %v2000
        %v2037 = vadd.f32 %v1976, %v2000
        %v2038 = vadd.f32 %v1977, %v2000
        %v2039 = vadd.f32 %v1978, %v2000
        %v2040 = vadd.f32 %v1979, %v2000
        %v2041 = vadd.f32 %v1980, %v2000
        %v2042 = vadd.f32 %v1981, %v2000
        %v2043 = vadd.f32 %v1982, %v2000
        %v2044 = vadd.f32 %v1983, %v2000
        %v2045 = vadd.f32 %v1984, %v2000
        %v2046 = vadd.f32 %v1985, %v2000
        %v2047 = vadd.f32 %v1986, %v2000
        %v2048 = vadd.f32 %v1987, %v2000
        %v2049 = vadd.f32 %v1988, %v2000
        %v2050 = vadd.f32 %v1989, %v2000
        %v2051 = vadd.f32 %v1990, %v2000
        %v2052 = vadd.f32 %v1991, %v2000
        %v2053 = vadd.f32 %v1992, %v2000
        %v2054 = vadd.f32 %v1993, %v2000
        %v2055 = vadd.f32 %v1994, %v2000
        %2056 = vst [vmem:[%s248] sm:$0xff] %v2002
        %2057 = vst [vmem:[%s248 + $0x8] sm:$0xff] %v2003
        %2058 = vst [vmem:[%s248 + $0x10] sm:$0xff] %v2004
        %2059 = vst [vmem:[%s248 + $0x18] sm:$0xff] %v2005
        %2060 = vst [vmem:[%s248 + $0x20] sm:$0xff] %v2006
        %2061 = vst [vmem:[%s248 + $0x28] sm:$0xff] %v2007
        %2062 = vst [vmem:[%s248 + $0x30] sm:$0xff] %v2008
        %2063 = vst [vmem:[%s248 + $0x38] sm:$0xff] %v2009
        %2064 = vst [vmem:[%s248 + $0x40] sm:$0xff] %v2010
        %2065 = vst [vmem:[%s248 + $0x48] sm:$0xff] %v2011
        %2066 = vst [vmem:[%s248 + $0x50] sm:$0xff] %v2012
        %2067 = vst [vmem:[%s248 + $0x58] sm:$0xff] %v2013
        %2068 = vst [vmem:[%s248 + $0x60] sm:$0xff] %v2014
        %2069 = vst [vmem:[%s248 + $0x68] sm:$0xff] %v2015
        %2070 = vst [vmem:[%s248 + $0x70] sm:$0xff] %v2016
        %2071 = vst [vmem:[%s248 + $0x78] sm:$0xff] %v2017
        %2072 = vst [vmem:[%s248 + $0x80] sm:$0xff] %v2018
        %2073 = vst [vmem:[%s248 + $0x88] sm:$0xff] %v2019
        %2074 = vst [vmem:[%s248 + $0x90] sm:$0xff] %v2020
        %2075 = vst [vmem:[%s248 + $0x98] sm:$0xff] %v2021
        %2076 = vst [vmem:[%s248 + $0xa0] sm:$0xff] %v2022
        %2077 = vst [vmem:[%s248 + $0xa8] sm:$0xff] %v2023
        %2078 = vst [vmem:[%s248 + $0xb0] sm:$0xff] %v2024
        %2079 = vst [vmem:[%s248 + $0xb8] sm:$0xff] %v2025
        %2080 = vst [vmem:[%s248 + $0xc0] sm:$0xff] %v2026
        %2081 = vst [vmem:[%s248 + $0xc8] sm:$0xff] %v2027
        %2082 = vst [vmem:[%s248 + $0xd0] sm:$0xff] %v2028
        %2083 = vst [vmem:[%s248 + $0xd8] sm:$0xff] %v2029
        %2084 = vst [vmem:[%s248 + $0xe0] sm:$0xff] %v2030
        %2085 = vst [vmem:[%s248 + $0xe8] sm:$0xff] %v2031
        %2086 = vst [vmem:[%s248 + $0xf0] sm:$0xff] %v2032
        %2087 = vst [vmem:[%s248 + $0xf8] sm:$0xff] %v2033
        %2088 = vst [vmem:[%s248 + $0x100] sm:$0xff] %v2034
        %2089 = vst [vmem:[%s248 + $0x108] sm:$0xff] %v2035
        %2090 = vst [vmem:[%s248 + $0x110] sm:$0xff] %v2036
        %2091 = vst [vmem:[%s248 + $0x118] sm:$0xff] %v2037
        %2092 = vst [vmem:[%s248 + $0x120] sm:$0xff] %v2038
        %2093 = vst [vmem:[%s248 + $0x128] sm:$0xff] %v2039
        %2094 = vst [vmem:[%s248 + $0x130] sm:$0xff] %v2040
        %2095 = vst [vmem:[%s248 + $0x138] sm:$0xff] %v2041
        %2096 = vst [vmem:[%s248 + $0x140] sm:$0xff] %v2042
        %2097 = vst [vmem:[%s248 + $0x148] sm:$0xff] %v2043
        %2098 = vst [vmem:[%s248 + $0x150] sm:$0xff] %v2044
        %2099 = vst [vmem:[%s248 + $0x158] sm:$0xff] %v2045
        %2100 = vst [vmem:[%s248 + $0x160] sm:$0xff] %v2046
        %2101 = vst [vmem:[%s248 + $0x168] sm:$0xff] %v2047
        %2102 = vst [vmem:[%s248 + $0x170] sm:$0xff] %v2048
        %2103 = vst [vmem:[%s248 + $0x178] sm:$0xff] %v2049
        %2104 = vst [vmem:[%s248 + $0x180] sm:$0xff] %v2050
        %2105 = vst [vmem:[%s248 + $0x188] sm:$0xff] %v2051
        %2106 = vst [vmem:[%s248 + $0x190] sm:$0xff] %v2052
        %2107 = vst [vmem:[%s248 + $0x198] sm:$0xff] %v2053
        %2108 = vst [vmem:[%s248 + $0x1a0] sm:$0xff] %v2054
        %2109 = vst [vmem:[%s248 + $0x1a8] sm:$0xff] %v2055
        %s2110 = sand.u32 %s140, 1
        %s2111 = scalar_lea.sflag [#allocation4], %s2110
        %s2112 = sand.u32 %s140, 1
        %s2113 = smul.addr %s2112, 432
        %s2114 = scalar_lea.vmem [#allocation5], %s2113
        // Predicated region
        $region37: #{tpu_custom_call.1} parent=31 // pred_check
          %p2115 = pneg %p150
        $region38: #{tpu_custom_call.1} parent=31 // pred_check_branch
          %2117 = sbr.rel (%p2115) target = $region40
        $region39: #{tpu_custom_call.1} parent=31 // pred_region
          %s2118 = smul.u32 18, %s25
          %s2120 = ssub.s32 6912, 6912
          %2121 = vsyncadd %s2111, %s2120
          %s2122 = smul.addr %s2118, 3
          %s2123 = sadd.s32 %s27, %s2122
          %s2124 = smul.addr %s24, 54
          %s2125 = sadd.s32 %s2123, %s2124
          %s2126 = smul.addr %s26, 108
          %s2127 = sadd.s32 %s2125, %s2126
          %s2128 = smul.addr %s2127, 128
          %s2129 = scalar_lea.hbm %s3, %s2128
          %s2130 = sshll.u32 %s2114, 4
          %s2131 = int_to_ptr.vmem [resolvable:$true] %s2130
          %2136 = dma.vmem_to_hbm [thread:$0]  %s2131, 6912, %s2129, %s2111, 128, 128, 8
        $region40: #{tpu_custom_call.1} parent=31 // pred_fallthru
          _
      $region32: #{tpu_custom_call.1} parent=5 // pred_fallthru
        _
      %p2137 = scmp.le.s32.totalorder 2, %s13
      // Predicated region
      $region41: #{tpu_custom_call.1} parent=5 // pred_check
        %p2138 = pneg %p2137
      $region42: #{tpu_custom_call.1} parent=5 // pred_check_branch
        %2140 = sbr.rel (%p2138) target = $region44
      $region43: #{tpu_custom_call.1} parent=5 // pred_region
        %s2141 = ssub.s32 %s13, 2
        // Predicated region
        $region45: #{tpu_custom_call.1} parent=43 // pred_check
          %p2142 = pneg %p156
        $region46: #{tpu_custom_call.1} parent=43 // pred_check_branch
          %2144 = sbr.rel (%p2142) target = $region48
        $region47: #{tpu_custom_call.1} parent=43 // pred_region
          %s2145 = sand.u32 %s141, 1
          %s2146 = scalar_lea.sflag [#allocation4], %s2145
          %s2147 = sand.u32 %s141, 1
          %s2148 = smul.addr %s2147, 432
          %s2149 = scalar_lea.vmem [#allocation5], %s2148
          %2150 = dma.done %s2146, 6912
        $region48: #{tpu_custom_call.1} parent=43 // pred_fallthru
          _
      $region44: #{tpu_custom_call.1} parent=5 // pred_fallthru
        _
    $region6: #{tpu_custom_call.1} parent=1 // loop_footer
      %s17 = sadd.s32 1, %s13
    $region7: #{tpu_custom_call.1} parent=1 // loop_footer_branch
      %12 = sbr.rel target = $region3
    $region8: #{tpu_custom_call.1} parent=1 // loop_exit
      _
    %2151 = vsyncpa [#allocation3], 1
    %s2152 = scalar_lea.sflag [#allocation3], 1
    %2153 = vsyncpa %s2152, 1
    %2154 = vsyncpa [#allocation4], 1
    %s2155 = scalar_lea.sflag [#allocation4], 1
    %2156 = vsyncpa %s2155, 1

</llo_original>
